<compile_context>
chip_gen: v7x
topology: tpu7x:2x2x1
jax: 0.10.0
libtpu: 0.0.40
codegen_flags: <defaults>
</compile_context>

<pallas_src>
import functools

import jax
import jax.numpy as jnp
from jax.experimental import pallas as pl
from jax.experimental.pallas import tpu as pltpu

_BN_EPS = 1e-5
_CP = 128                        # output-channel padding -> lane-dense stores
_TM_MAT = 512                    # target rows per M tile, matmul pass
_TM_ELEM = 1024                  # target rows per M tile, elementwise pass
_VMEM_LIMIT = 32 * 1024 * 1024   # fits scoped VMEM on v5e/v6e/v7x


def _round_up(x, m):
  return -(-x // m) * m


def _pick_tiles(m, target):
  """Adaptive M tiling: tiny layers get one exact tile; larger layers get
  >= 2 tiles of ~`target` rows (16-aligned) so both v7x TensorCores work."""
  if m < 128:
    return _round_up(max(m, 16), 16), 1
  mt = max(2, -(-m // target))
  tm = _round_up(-(-m // mt), 16)
  mt = -(-m // tm)
  return tm, mt


# ---------------------------------------------------------------------------
# Pallas kernels
# ---------------------------------------------------------------------------
def _matmul_stats_kernel(x_ref, w_ref, y_ref, stats_ref):
  """One M tile of conv-as-matmul with fused BN batch-statistic partials.

  Dense tap packing: the whole kh*kw*cin reduction fits in one K block, so
  there is no reduction grid axis and the (K, CP) weight block stays VMEM
  resident across all M tiles (its index_map ignores the grid index).

  x_ref:     (TM, K)  bf16 densely packed im2col rows for this M tile
  w_ref:     (K, CP)  bf16 weights (resident)
  y_ref:     (TM, CP) conv output tile (bf16 intermediate / f32 final)
  stats_ref: (8, CP)  f32 partials: row0 = sum(y), row1 = sum(y*y)
                      (rows 2..7 are never read host-side)
  """
  y = jnp.dot(x_ref[...], w_ref[...], preferred_element_type=jnp.float32)
  y_ref[...] = y.astype(y_ref.dtype)
  stats_ref[0:1, :] = jnp.sum(y, axis=0, keepdims=True)
  stats_ref[1:2, :] = jnp.sum(y * y, axis=0, keepdims=True)


def _affine_act_kernel(y_ref, sc_ref, bi_ref, o_ref, *, relu):
  """y * scale + bias (folded BatchNorm) [+ ReLU]; no-residual variant."""
  v = y_ref[...].astype(jnp.float32) * sc_ref[...] + bi_ref[...]
  if relu:
    v = jnp.maximum(v, 0.0)
  o_ref[...] = v.astype(o_ref.dtype)


def _affine_res_act_kernel(y_ref, sc_ref, bi_ref, r_ref, o_ref, *, relu):
  """y * scale + bias + residual [+ ReLU]."""
  v = (y_ref[...].astype(jnp.float32) * sc_ref[...] + bi_ref[...]
       + r_ref[...].astype(jnp.float32))
  if relu:
    v = jnp.maximum(v, 0.0)
  o_ref[...] = v.astype(o_ref.dtype)


# ---------------------------------------------------------------------------
# pallas_call wrappers
# ---------------------------------------------------------------------------
def _matmul_stats(cols, wmat, out_dtype):
  """cols (M, K) bf16 @ wmat (Kp, CP) bf16 -> (y[:M], sum, sum_sq)."""
  m, k = cols.shape
  kp, cp = wmat.shape
  if kp != k:                            # zero K padding: exact, contributes 0
    cols = jnp.pad(cols, ((0, 0), (0, kp - k)))
  tm, mt = _pick_tiles(m, _TM_MAT)
  mp = tm * mt
  if mp != m:                            # zero rows: contribute 0 to the stats
    cols = jnp.pad(cols, ((0, mp - m), (0, 0)))

  y, stats = pl.pallas_call(
      _matmul_stats_kernel,
      out_shape=(jax.ShapeDtypeStruct((mp, cp), out_dtype),
                 jax.ShapeDtypeStruct((mt * 8, cp), jnp.float32)),
      grid_spec=pltpu.PrefetchScalarGridSpec(
          num_scalar_prefetch=0,
          grid=(mt,),
          in_specs=[pl.BlockSpec((tm, kp), lambda i: (i, 0)),
                    pl.BlockSpec((kp, cp), lambda i: (0, 0))],   # resident
          out_specs=[pl.BlockSpec((tm, cp), lambda i: (i, 0)),
                     pl.BlockSpec((8, cp), lambda i: (i, 0))]),
      compiler_params=pltpu.CompilerParams(
          dimension_semantics=("parallel",),
          vmem_limit_bytes=_VMEM_LIMIT),
  )(cols, wmat)

  part = stats.reshape(mt, 8, cp)
  return y[:m], jnp.sum(part[:, 0, :], 0), jnp.sum(part[:, 1, :], 0)


def _affine_act(y, scale, bias, residual, relu):
  """Folded-BN affine [+ residual] [+ ReLU]; bf16 in / bf16 out."""
  m, cp = y.shape
  tm, mt = _pick_tiles(m, _TM_ELEM)
  mp = tm * mt
  if mp != m:
    y = jnp.pad(y, ((0, mp - m), (0, 0)))
  in_specs = [pl.BlockSpec((tm, cp), lambda i: (i, 0)),
              pl.BlockSpec((1, cp), lambda i: (0, 0)),
              pl.BlockSpec((1, cp), lambda i: (0, 0))]
  args = [y, scale.reshape(1, cp), bias.reshape(1, cp)]
  if residual is not None:
    if mp != m:
      residual = jnp.pad(residual, ((0, mp - m), (0, 0)))
    in_specs.append(pl.BlockSpec((tm, cp), lambda i: (i, 0)))
    args.append(residual)
    kernel = functools.partial(_affine_res_act_kernel, relu=relu)
  else:
    kernel = functools.partial(_affine_act_kernel, relu=relu)

  out = pl.pallas_call(
      kernel,
      out_shape=jax.ShapeDtypeStruct((mp, cp), jnp.bfloat16),
      grid_spec=pltpu.PrefetchScalarGridSpec(
          num_scalar_prefetch=0,
          grid=(mt,),
          in_specs=in_specs,
          out_specs=pl.BlockSpec((tm, cp), lambda i: (i, 0))),
      compiler_params=pltpu.CompilerParams(
          dimension_semantics=("parallel",),
          vmem_limit_bytes=_VMEM_LIMIT),
  )(*args)
  return out[:m]


def _bn_fold(s, ss, count, gamma, beta):
  """PyTorch training-mode BatchNorm folded into per-channel scale/bias.
  NOTE: one-pass variance (E[y^2]-E[y]^2) in f32, clamped at 0 -- can drift
  slightly from PyTorch's two-pass result for large-mean activations."""
  mean = s / count
  var = jnp.maximum(ss / count - mean * mean, 0.0)
  scale = gamma * jax.lax.rsqrt(var + _BN_EPS)
  bias = beta - mean * scale
  return scale, bias


# ---------------------------------------------------------------------------
# Convolution glue (dense-channel im2col, weight packing)
# ---------------------------------------------------------------------------
def _wmat(w_hwio):
  """(kh, kw, cin, cout) f32 -> (Kp, CP) bf16: taps densely packed along K
  (K = kh*kw*cin, zero-padded up to a multiple of 128), cout padded to CP."""
  kh, kw, cin, cout = w_hwio.shape
  k = kh * kw * cin
  kp = _round_up(k, 128)
  wm = w_hwio.reshape(k, cout)
  wm = jnp.pad(wm, ((0, kp - k), (0, _CP - cout)))
  return wm.astype(jnp.bfloat16)


def _im2col_valid(xp, kh, kw):
  """Stride-1 'valid' im2col with DENSE channel packing:
  (N, Hp, Wp, C) -> (N*Ho*Wo, kh*kw*C)."""
  # TODO(synk): with only 8 real channels an in-kernel per-tap DMA would need
  # W-halo windows plus a sublane-interleaving reshape at 8-wide lanes; the
  # dense (<=128-column) XLA-side im2col is cheaper at these shapes.
  n, hp, wp, c = xp.shape
  ho, wo = hp - kh + 1, wp - kw + 1
  taps = [xp[:, dh:dh + ho, dw:dw + wo, :]
          for dh in range(kh) for dw in range(kw)]
  cols = jnp.concatenate(taps, axis=-1)
  return cols.reshape(n * ho * wo, kh * kw * c), (n, ho, wo)


def _conv3x3_bn(x, wmat, cin, gamma, beta, *, residual=None, relu=True):
  """3x3 / stride-1 / pad-1 conv + BatchNorm(train) [+ residual] + ReLU.
  x: (N, H, W, CP) bf16 activations; only the first `cin` channels are real."""
  n, h, w, _ = x.shape
  xp = jnp.pad(x[..., :cin], ((0, 0), (1, 1), (1, 1), (0, 0)))
  cols, _ = _im2col_valid(xp, 3, 3)
  y, s, ss = _matmul_stats(cols, wmat, jnp.bfloat16)
  scale, bias = _bn_fold(s, ss, n * h * w, gamma, beta)
  res = None if residual is None else residual.reshape(n * h * w, _CP)
  out = _affine_act(y, scale, bias, res, relu)
  return out.reshape(n, h, w, _CP)


# ---------------------------------------------------------------------------
# Stride-2 ConvTranspose2d via 4-phase (output-parity) decomposition
# ---------------------------------------------------------------------------
def _phase_1d(size_in, k, p, op, r):
  """Output-parity class r of a stride-2 ConvTranspose along one spatial dim.
  Returns (out_size, first_tap, num_taps, num_outputs, input_offset) such that
    y[2u + r] = sum_s x[u + s + off] * w_flipped[2s + e]   (x = 0 outside)."""
  lo = k - 1 - p
  out = (size_in - 1) * 2 - 2 * p + k + op
  e = (lo + r) % 2
  s = len(range(e, k, 2))
  u = (out - r + 1) // 2
  off = (r + e - lo) // 2            # (r + e - lo) is even by construction
  return out, e, s, u, off


def _phase_window(x, axis, off, u, s):
  """Zero-padded window x[off : off + u + s - 1] along `axis`."""
  size = x.shape[axis]
  lo_need, hi_need = off, off + u + s - 2
  pad_lo = max(0, -lo_need)
  crop_lo = max(0, lo_need)
  stop = max(crop_lo, min(size, hi_need + 1))
  pad_hi = (u + s - 1) - pad_lo - (stop - crop_lo)
  idx = [slice(None)] * x.ndim
  idx[axis] = slice(crop_lo, stop)
  pads = [(0, 0)] * x.ndim
  pads[axis] = (pad_lo, pad_hi)
  return jnp.pad(x[tuple(idx)], pads)


def _conv_transpose_s2(x, w_hwio, k, p, op, *, gamma=None, beta=None,
                       residual=None, relu=False):
  """ConvTranspose2d(k, stride=2, padding=p, output_padding=op) as 4 small
  stride-1 convs on the UN-dilated input (one per output parity), interleaved
  into the full output grid.  Parities that receive no kernel taps (e.g. the
  1x1 shortcut) are skipped -- they are exactly zero.  BN batch statistics are
  accumulated across phases and applied in one fused affine pass."""
  n, hi, wi = x.shape[0], x.shape[1], x.shape[2]
  cin = w_hwio.shape[2]
  x_real = x[..., :cin]
  ho = (hi - 1) * 2 - 2 * p + k + op
  wo = (wi - 1) * 2 - 2 * p + k + op
  y_dtype = jnp.float32 if gamma is None else jnp.bfloat16
  y_full = jnp.zeros((n, ho, wo, _CP), y_dtype)
  s_tot = jnp.zeros((_CP,), jnp.float32)
  ss_tot = jnp.zeros((_CP,), jnp.float32)

  for rh in (0, 1):
    _, eh, sh, uh, offh = _phase_1d(hi, k, p, op, rh)
    for rw in (0, 1):
      _, ew, sw, uw, offw = _phase_1d(wi, k, p, op, rw)
      if sh == 0 or sw == 0 or uh == 0 or uw == 0:
        continue                       # this parity only ever sees zeros
      xe = _phase_window(x_real, 1, offh, uh, sh)
      xe = _phase_window(xe, 2, offw, uw, sw)
      cols, _ = _im2col_valid(xe, sh, sw)
      wm = _wmat(w_hwio[eh::2, ew::2, :, :])
      y_p, s_p, ss_p = _matmul_stats(cols, wm, y_dtype)
      y_full = y_full.at[:, rh::2, rw::2, :].set(y_p.reshape(n, uh, uw, _CP))
      s_tot = s_tot + s_p
      ss_tot = ss_tot + ss_p

  if gamma is None:                    # final_conv path: raw output, no BN
    return y_full
  m_tot = n * ho * wo                  # BN sees the all-zero parities too
  scale, bias = _bn_fold(s_tot, ss_tot, m_tot, gamma, beta)
  res = None if residual is None else residual.reshape(m_tot, _CP)
  out = _affine_act(y_full.reshape(m_tot, _CP), scale, bias, res, relu)
  return out.reshape(n, ho, wo, _CP)


# ---------------------------------------------------------------------------
# Decoder_Group forward
# ---------------------------------------------------------------------------
def _residual_block(x, conv_wmat, cin, gamma, beta):
  shortcut = x
  x = _conv3x3_bn(x, conv_wmat, cin, gamma, beta, relu=True)
  x = _conv3x3_bn(x, conv_wmat, cin, gamma, beta, relu=True)
  x = _conv3x3_bn(x, conv_wmat, cin, gamma, beta, residual=shortcut, relu=True)
  return x


def _standard_group(x, p, cin, num_of_blocks, output_padding):
  # The PyTorch module really does reuse self.conv / self.in_bn for every 3x3
  # conv and self.out_bn for both the shortcut and out_conv paths.
  conv_wmat = _wmat(p["conv_w"])
  for _ in range(num_of_blocks - 1):
    x = _residual_block(x, conv_wmat, cin, p["in_bn_gamma"], p["in_bn_beta"])
  shortcut = _conv_transpose_s2(
      x, p["out_shortcut_w"], 1, 0, output_padding,
      gamma=p["out_bn_gamma"], beta=p["out_bn_beta"], relu=False)
  x = _conv3x3_bn(x, conv_wmat, cin, p["in_bn_gamma"], p["in_bn_beta"],
                  relu=True)
  x = _conv3x3_bn(x, conv_wmat, cin, p["in_bn_gamma"], p["in_bn_beta"],
                  relu=True)
  x = _conv_transpose_s2(
      x, p["out_conv_w"], 3, 1, output_padding,
      gamma=p["out_bn_gamma"], beta=p["out_bn_beta"],
      residual=shortcut, relu=True)
  return x


def _max_unpool_3x3_s2(x_real, mp_idx):
  """nn.MaxUnpool2d(3, stride=2) with the spec's explicit output_size
  (2H+2, 2W+2); PyTorch flat spatial indices (the channel entry of
  desired_shape is ignored, matching F.max_unpool2d)."""
  # TODO(synk): data-dependent scatter kept in plain JAX (no clean Pallas TPU
  # equivalent).
  n, h, w, c = x_real.shape
  out_h = mp_idx.shape[2] * 2 + 2
  out_w = mp_idx.shape[3] * 2 + 2
  idx = jnp.transpose(mp_idx, (0, 2, 3, 1)).reshape(n, h * w, c)
  vals = x_real.reshape(n, h * w, c)
  flat = jnp.zeros((n, out_h * out_w, c), x_real.dtype)
  flat = flat.at[jnp.arange(n)[:, None, None], idx,
                 jnp.arange(c)[None, None, :]].set(vals)
  return flat.reshape(n, out_h, out_w, c)


def _final_group(x, p, cin, num_of_blocks, mp_idx):
  conv_wmat = _wmat(p["conv_w"])
  for _ in range(num_of_blocks):
    x = _residual_block(x, conv_wmat, cin, p["in_bn_gamma"], p["in_bn_beta"])
  x_up = _max_unpool_3x3_s2(x[..., :cin], mp_idx)
  # final_conv: ConvTranspose2d(cin, 2, k=7, stride=2, output_padding=1),
  # no BN / ReLU.
  return _conv_transpose_s2(x_up, p["final_w"], 7, 0, 1)


def decoder_group_forward(x_nchw, params, mp_idx=None, *, in_channels,
                          out_channels, num_of_blocks, end=False,
                          output_padding=0):
  """Mirrors Decoder_Group.forward.  Input/output are NCHW like PyTorch."""
  x = jnp.transpose(x_nchw, (0, 2, 3, 1)).astype(jnp.bfloat16)  # NCHW -> NHWC
  x = jnp.pad(x, ((0, 0), (0, 0), (0, 0), (0, _CP - in_channels)))
  if not end:
    y = _standard_group(x, params, in_channels, num_of_blocks, output_padding)
    y = y[..., :out_channels]
  else:
    y = _final_group(x, params, in_channels, num_of_blocks, mp_idx)
    y = y[..., :2]
  return jnp.transpose(y, (0, 3, 1, 2)).astype(jnp.float32)     # NHWC -> NCHW


# ---------------------------------------------------------------------------
# Synthetic parameters (shapes from Decoder_Group.__init__)
# ---------------------------------------------------------------------------
def init_params(key, in_channels, out_channels):
  """Conv weights stored densely in conv-equivalent HWIO (kh, kw, cin, cout);
  for the ConvTranspose2d layers this is the PyTorch (cin, cout, kh, kw)
  weight transposed to HWIO and spatially flipped.  BN vectors are padded to
  _CP with zeros (padded channels get gamma=0 -> stay exactly zero)."""
  k1, k2, k3, k4 = jax.random.split(key, 4)

  def w(k, kh, kw, cin, cout):
    scale = 1.0 / jnp.sqrt(jnp.float32(kh * kw * cin))
    return scale * jax.random.normal(k, (kh, kw, cin, cout), jnp.float32)

  def vec(v):
    return jnp.pad(v.astype(jnp.float32), (0, _CP - v.shape[0]))

  return {
      "conv_w": w(k1, 3, 3, in_channels, in_channels),
      "out_conv_w": w(k2, 3, 3, in_channels, out_channels),
      "out_shortcut_w": w(k3, 1, 1, in_channels, out_channels),
      "final_w": w(k4, 7, 7, in_channels, 2),
      "in_bn_gamma": vec(jnp.ones(in_channels)),
      "in_bn_beta": vec(jnp.zeros(in_channels)),
      "out_bn_gamma": vec(jnp.ones(out_channels)),
      "out_bn_beta": vec(jnp.zeros(out_channels)),
  }


if __name__ == "__main__":
  key = jax.random.PRNGKey(0)
  in_ch, out_ch, num_blocks, out_pad = 8, 4, 2, 1
  pkey, xkey = jax.random.split(key)
  params = init_params(pkey, in_ch, out_ch)

  n, h, w = 2, 8, 8
  x = jax.random.normal(xkey, (n, in_ch, h, w), jnp.float32)    # NCHW

  fwd = jax.jit(decoder_group_forward,
                static_argnames=("in_channels", "out_channels",
                                 "num_of_blocks", "end", "output_padding"))

  # end=False -> _standard_group path.
  y_std = fwd(x, params, in_channels=in_ch, out_channels=out_ch,
              num_of_blocks=num_blocks, end=False, output_padding=out_pad)

  # end=True -> _final_group path; synthesize a valid encoder mp_idx
  # (flat indices into the (2h+2, 2w+2) pre-pool spatial grid).
  h_up, w_up = 2 * h + 2, 2 * w + 2
  idx2d = (2 * jnp.arange(h) + 1)[:, None] * w_up + (2 * jnp.arange(w) + 1)
  mp_idx = jnp.broadcast_to(idx2d, (n, in_ch, h, w)).astype(jnp.int32)
  y_fin = fwd(x, params, mp_idx, in_channels=in_ch, out_channels=out_ch,
              num_of_blocks=num_blocks, end=True, output_padding=out_pad)

  jax.block_until_ready((y_std, y_fin))
  assert y_std.shape == (n, out_ch, 2 * h - 1 + out_pad, 2 * w - 1 + out_pad)
  assert y_fin.shape == (n, 2, 2 * h_up + 6, 2 * w_up + 6)
  assert bool(jnp.isfinite(y_std).all()) and bool(jnp.isfinite(y_fin).all())
  print("KERNEL_OK")
</pallas_src>

<mosaic_0001>
module attributes {stable_mosaic.version = 11 : i64} {
  func.func @_matmul_stats_kernel(%arg0: i32, %arg1: memref<64x128xbf16, #tpu.memory_space<vmem>>, %arg2: memref<128x128xbf16, #tpu.memory_space<vmem>>, %arg3: memref<64x128xbf16, #tpu.memory_space<vmem>>, %arg4: memref<8x128xf32, #tpu.memory_space<vmem>>) attributes {dimension_semantics = [#tpu.dimension_semantics<parallel>], iteration_bounds = array<i64: 2>, scalar_prefetch = 0 : i64, scratch_operands = 0 : i64, tpu.core_type = #tpu.core_type<tc>, window_params = [{transform_indices = @transform_0, window_bounds = array<i64: 64, 128>}, {pipeline_mode = #tpu.pipeline_mode<synchronous>, transform_indices = @transform_1, window_bounds = array<i64: 128, 128>}, {transform_indices = @transform_2, window_bounds = array<i64: 64, 128>}, {transform_indices = @transform_3, window_bounds = array<i64: 8, 128>}]} {
    %c0 = arith.constant 0 : index
    %c0_0 = arith.constant 0 : index
    %0 = vector.load %arg1[%c0, %c0_0] : memref<64x128xbf16, #tpu.memory_space<vmem>>, vector<64x128xbf16>
    %c0_1 = arith.constant 0 : index
    %c0_2 = arith.constant 0 : index
    %1 = vector.load %arg2[%c0_1, %c0_2] : memref<128x128xbf16, #tpu.memory_space<vmem>>, vector<128x128xbf16>
    %cst = arith.constant dense<0.000000e+00> : vector<64x128xf32>
    %2 = tpu.matmul %0, %1, %cst {dimension_numbers = #tpu.dot_dimension_numbers<[1], [0], [0], [1], [0, 0, 1, 1], [], []>} : vector<64x128xbf16>, vector<128x128xbf16>, vector<64x128xf32> -> vector<64x128xf32>
    %3 = arith.truncf %2 : vector<64x128xf32> to vector<64x128xbf16>
    %c0_3 = arith.constant 0 : index
    %c0_4 = arith.constant 0 : index
    %4 = vector.load %arg3[%c0_3, %c0_4] : memref<64x128xbf16, #tpu.memory_space<vmem>>, vector<64x128xbf16>
    tpu.vector_store %arg3[%c0_3, %c0_4], %3 {strides = array<i32>} : memref<64x128xbf16, #tpu.memory_space<vmem>>, vector<64x128xbf16>,
    %cst_5 = arith.constant dense<0.000000e+00> : vector<128xf32>
    %5 = vector.multi_reduction <add>, %2, %cst_5 [0] : vector<64x128xf32> to vector<128xf32>
    %6 = vector.shape_cast %5 : vector<128xf32> to vector<1x128xf32>
    %c0_6 = arith.constant 0 : index
    %c0_7 = arith.constant 0 : index
    %7 = vector.load %arg4[%c0_6, %c0_7] : memref<8x128xf32, #tpu.memory_space<vmem>>, vector<1x128xf32>
    tpu.vector_store %arg4[%c0_6, %c0_7], %6 {strides = array<i32>} : memref<8x128xf32, #tpu.memory_space<vmem>>, vector<1x128xf32>,
    %8 = arith.mulf %2, %2 : vector<64x128xf32>
    %cst_8 = arith.constant dense<0.000000e+00> : vector<128xf32>
    %9 = vector.multi_reduction <add>, %8, %cst_8 [0] : vector<64x128xf32> to vector<128xf32>
    %10 = vector.shape_cast %9 : vector<128xf32> to vector<1x128xf32>
    %c1 = arith.constant 1 : index
    %c0_9 = arith.constant 0 : index
    %11 = vector.load %arg4[%c1, %c0_9] : memref<8x128xf32, #tpu.memory_space<vmem>>, vector<1x128xf32>
    tpu.vector_store %arg4[%c1, %c0_9], %10 {strides = array<i32>} : memref<8x128xf32, #tpu.memory_space<vmem>>, vector<1x128xf32>,
    return
  }
  func.func @transform_0(%arg0: i32) -> (i32, i32) {
    %c0_i32 = arith.constant 0 : i32
    %c0_i32_0 = arith.constant 0 : i32
    return %arg0, %c0_i32 : i32, i32
  }
  func.func @transform_1(%arg0: i32) -> (i32, i32) {
    %c0_i32 = arith.constant 0 : i32
    %c0_i32_0 = arith.constant 0 : i32
    %c0_i32_1 = arith.constant 0 : i32
    return %c0_i32, %c0_i32_0 : i32, i32
  }
  func.func @transform_2(%arg0: i32) -> (i32, i32) {
    %c0_i32 = arith.constant 0 : i32
    %c0_i32_0 = arith.constant 0 : i32
    return %arg0, %c0_i32 : i32, i32
  }
  func.func @transform_3(%arg0: i32) -> (i32, i32) {
    %c0_i32 = arith.constant 0 : i32
    %c0_i32_0 = arith.constant 0 : i32
    return %arg0, %c0_i32 : i32, i32
  }
}

module attributes {stable_mosaic.version = 11 : i64} {
  func.func @_affine_act_kernel(%arg0: i32, %arg1: memref<64x128xbf16, #tpu.memory_space<vmem>>, %arg2: memref<1x128xf32, #tpu.memory_space<vmem>>, %arg3: memref<1x128xf32, #tpu.memory_space<vmem>>, %arg4: memref<64x128xbf16, #tpu.memory_space<vmem>>) attributes {dimension_semantics = [#tpu.dimension_semantics<parallel>], iteration_bounds = array<i64: 2>, scalar_prefetch = 0 : i64, scratch_operands = 0 : i64, tpu.core_type = #tpu.core_type<tc>, window_params = [{transform_indices = @transform_0, window_bounds = array<i64: 64, 128>}, {pipeline_mode = #tpu.pipeline_mode<synchronous>, transform_indices = @transform_1, window_bounds = array<i64: 1, 128>}, {pipeline_mode = #tpu.pipeline_mode<synchronous>, transform_indices = @transform_2, window_bounds = array<i64: 1, 128>}, {transform_indices = @transform_3, window_bounds = array<i64: 64, 128>}]} {
    %c0 = arith.constant 0 : index
    %c0_0 = arith.constant 0 : index
    %0 = vector.load %arg1[%c0, %c0_0] : memref<64x128xbf16, #tpu.memory_space<vmem>>, vector<64x128xbf16>
    %1 = arith.extf %0 : vector<64x128xbf16> to vector<64x128xf32>
    %c0_1 = arith.constant 0 : index
    %c0_2 = arith.constant 0 : index
    %2 = vector.load %arg2[%c0_1, %c0_2] : memref<1x128xf32, #tpu.memory_space<vmem>>, vector<1x128xf32>
    %3 = vector.broadcast %2 : vector<1x128xf32> to vector<64x128xf32>
    %4 = arith.mulf %1, %3 : vector<64x128xf32>
    %c0_3 = arith.constant 0 : index
    %c0_4 = arith.constant 0 : index
    %5 = vector.load %arg3[%c0_3, %c0_4] : memref<1x128xf32, #tpu.memory_space<vmem>>, vector<1x128xf32>
    %6 = vector.broadcast %5 : vector<1x128xf32> to vector<64x128xf32>
    %7 = arith.addf %4, %6 : vector<64x128xf32>
    %cst = arith.constant 0.000000e+00 : f32
    %8 = vector.broadcast %cst : f32 to vector<64x128xf32>
    %9 = arith.maximumf %7, %8 : vector<64x128xf32>
    %10 = arith.truncf %9 : vector<64x128xf32> to vector<64x128xbf16>
    %c0_5 = arith.constant 0 : index
    %c0_6 = arith.constant 0 : index
    %11 = vector.load %arg4[%c0_5, %c0_6] : memref<64x128xbf16, #tpu.memory_space<vmem>>, vector<64x128xbf16>
    tpu.vector_store %arg4[%c0_5, %c0_6], %10 {strides = array<i32>} : memref<64x128xbf16, #tpu.memory_space<vmem>>, vector<64x128xbf16>,
    return
  }
  func.func @transform_0(%arg0: i32) -> (i32, i32) {
    %c0_i32 = arith.constant 0 : i32
    %c0_i32_0 = arith.constant 0 : i32
    return %arg0, %c0_i32 : i32, i32
  }
  func.func @transform_1(%arg0: i32) -> (i32, i32) {
    %c0_i32 = arith.constant 0 : i32
    %c0_i32_0 = arith.constant 0 : i32
    %c0_i32_1 = arith.constant 0 : i32
    return %c0_i32, %c0_i32_0 : i32, i32
  }
  func.func @transform_2(%arg0: i32) -> (i32, i32) {
    %c0_i32 = arith.constant 0 : i32
    %c0_i32_0 = arith.constant 0 : i32
    %c0_i32_1 = arith.constant 0 : i32
    return %c0_i32, %c0_i32_0 : i32, i32
  }
  func.func @transform_3(%arg0: i32) -> (i32, i32) {
    %c0_i32 = arith.constant 0 : i32
    %c0_i32_0 = arith.constant 0 : i32
    return %arg0, %c0_i32 : i32, i32
  }
}

module attributes {stable_mosaic.version = 11 : i64} {
  func.func @_affine_res_act_kernel(%arg0: i32, %arg1: memref<64x128xbf16, #tpu.memory_space<vmem>>, %arg2: memref<1x128xf32, #tpu.memory_space<vmem>>, %arg3: memref<1x128xf32, #tpu.memory_space<vmem>>, %arg4: memref<64x128xbf16, #tpu.memory_space<vmem>>, %arg5: memref<64x128xbf16, #tpu.memory_space<vmem>>) attributes {dimension_semantics = [#tpu.dimension_semantics<parallel>], iteration_bounds = array<i64: 2>, scalar_prefetch = 0 : i64, scratch_operands = 0 : i64, tpu.core_type = #tpu.core_type<tc>, window_params = [{transform_indices = @transform_0, window_bounds = array<i64: 64, 128>}, {pipeline_mode = #tpu.pipeline_mode<synchronous>, transform_indices = @transform_1, window_bounds = array<i64: 1, 128>}, {pipeline_mode = #tpu.pipeline_mode<synchronous>, transform_indices = @transform_2, window_bounds = array<i64: 1, 128>}, {transform_indices = @transform_3, window_bounds = array<i64: 64, 128>}, {transform_indices = @transform_4, window_bounds = array<i64: 64, 128>}]} {
    %c0 = arith.constant 0 : index
    %c0_0 = arith.constant 0 : index
    %0 = vector.load %arg1[%c0, %c0_0] : memref<64x128xbf16, #tpu.memory_space<vmem>>, vector<64x128xbf16>
    %1 = arith.extf %0 : vector<64x128xbf16> to vector<64x128xf32>
    %c0_1 = arith.constant 0 : index
    %c0_2 = arith.constant 0 : index
    %2 = vector.load %arg2[%c0_1, %c0_2] : memref<1x128xf32, #tpu.memory_space<vmem>>, vector<1x128xf32>
    %3 = vector.broadcast %2 : vector<1x128xf32> to vector<64x128xf32>
    %4 = arith.mulf %1, %3 : vector<64x128xf32>
    %c0_3 = arith.constant 0 : index
    %c0_4 = arith.constant 0 : index
    %5 = vector.load %arg3[%c0_3, %c0_4] : memref<1x128xf32, #tpu.memory_space<vmem>>, vector<1x128xf32>
    %6 = vector.broadcast %5 : vector<1x128xf32> to vector<64x128xf32>
    %7 = arith.addf %4, %6 : vector<64x128xf32>
    %c0_5 = arith.constant 0 : index
    %c0_6 = arith.constant 0 : index
    %8 = vector.load %arg4[%c0_5, %c0_6] : memref<64x128xbf16, #tpu.memory_space<vmem>>, vector<64x128xbf16>
    %9 = arith.extf %8 : vector<64x128xbf16> to vector<64x128xf32>
    %10 = arith.addf %7, %9 : vector<64x128xf32>
    %cst = arith.constant 0.000000e+00 : f32
    %11 = vector.broadcast %cst : f32 to vector<64x128xf32>
    %12 = arith.maximumf %10, %11 : vector<64x128xf32>
    %13 = arith.truncf %12 : vector<64x128xf32> to vector<64x128xbf16>
    %c0_7 = arith.constant 0 : index
    %c0_8 = arith.constant 0 : index
    %14 = vector.load %arg5[%c0_7, %c0_8] : memref<64x128xbf16, #tpu.memory_space<vmem>>, vector<64x128xbf16>
    tpu.vector_store %arg5[%c0_7, %c0_8], %13 {strides = array<i32>} : memref<64x128xbf16, #tpu.memory_space<vmem>>, vector<64x128xbf16>,
    return
  }
  func.func @transform_0(%arg0: i32) -> (i32, i32) {
    %c0_i32 = arith.constant 0 : i32
    %c0_i32_0 = arith.constant 0 : i32
    return %arg0, %c0_i32 : i32, i32
  }
  func.func @transform_1(%arg0: i32) -> (i32, i32) {
    %c0_i32 = arith.constant 0 : i32
    %c0_i32_0 = arith.constant 0 : i32
    %c0_i32_1 = arith.constant 0 : i32
    return %c0_i32, %c0_i32_0 : i32, i32
  }
  func.func @transform_2(%arg0: i32) -> (i32, i32) {
    %c0_i32 = arith.constant 0 : i32
    %c0_i32_0 = arith.constant 0 : i32
    %c0_i32_1 = arith.constant 0 : i32
    return %c0_i32, %c0_i32_0 : i32, i32
  }
  func.func @transform_3(%arg0: i32) -> (i32, i32) {
    %c0_i32 = arith.constant 0 : i32
    %c0_i32_0 = arith.constant 0 : i32
    return %arg0, %c0_i32 : i32, i32
  }
  func.func @transform_4(%arg0: i32) -> (i32, i32) {
    %c0_i32 = arith.constant 0 : i32
    %c0_i32_0 = arith.constant 0 : i32
    return %arg0, %c0_i32 : i32, i32
  }
}

module attributes {stable_mosaic.version = 11 : i64} {
  func.func @_affine_act_kernel(%arg0: i32, %arg1: memref<256x128xbf16, #tpu.memory_space<vmem>>, %arg2: memref<1x128xf32, #tpu.memory_space<vmem>>, %arg3: memref<1x128xf32, #tpu.memory_space<vmem>>, %arg4: memref<256x128xbf16, #tpu.memory_space<vmem>>) attributes {dimension_semantics = [#tpu.dimension_semantics<parallel>], iteration_bounds = array<i64: 2>, scalar_prefetch = 0 : i64, scratch_operands = 0 : i64, tpu.core_type = #tpu.core_type<tc>, window_params = [{transform_indices = @transform_0, window_bounds = array<i64: 256, 128>}, {pipeline_mode = #tpu.pipeline_mode<synchronous>, transform_indices = @transform_1, window_bounds = array<i64: 1, 128>}, {pipeline_mode = #tpu.pipeline_mode<synchronous>, transform_indices = @transform_2, window_bounds = array<i64: 1, 128>}, {transform_indices = @transform_3, window_bounds = array<i64: 256, 128>}]} {
    %c0 = arith.constant 0 : index
    %c0_0 = arith.constant 0 : index
    %0 = vector.load %arg1[%c0, %c0_0] : memref<256x128xbf16, #tpu.memory_space<vmem>>, vector<256x128xbf16>
    %1 = arith.extf %0 : vector<256x128xbf16> to vector<256x128xf32>
    %c0_1 = arith.constant 0 : index
    %c0_2 = arith.constant 0 : index
    %2 = vector.load %arg2[%c0_1, %c0_2] : memref<1x128xf32, #tpu.memory_space<vmem>>, vector<1x128xf32>
    %3 = vector.broadcast %2 : vector<1x128xf32> to vector<256x128xf32>
    %4 = arith.mulf %1, %3 : vector<256x128xf32>
    %c0_3 = arith.constant 0 : index
    %c0_4 = arith.constant 0 : index
    %5 = vector.load %arg3[%c0_3, %c0_4] : memref<1x128xf32, #tpu.memory_space<vmem>>, vector<1x128xf32>
    %6 = vector.broadcast %5 : vector<1x128xf32> to vector<256x128xf32>
    %7 = arith.addf %4, %6 : vector<256x128xf32>
    %8 = arith.truncf %7 : vector<256x128xf32> to vector<256x128xbf16>
    %c0_5 = arith.constant 0 : index
    %c0_6 = arith.constant 0 : index
    %9 = vector.load %arg4[%c0_5, %c0_6] : memref<256x128xbf16, #tpu.memory_space<vmem>>, vector<256x128xbf16>
    tpu.vector_store %arg4[%c0_5, %c0_6], %8 {strides = array<i32>} : memref<256x128xbf16, #tpu.memory_space<vmem>>, vector<256x128xbf16>,
    return
  }
  func.func @transform_0(%arg0: i32) -> (i32, i32) {
    %c0_i32 = arith.constant 0 : i32
    %c0_i32_0 = arith.constant 0 : i32
    return %arg0, %c0_i32 : i32, i32
  }
  func.func @transform_1(%arg0: i32) -> (i32, i32) {
    %c0_i32 = arith.constant 0 : i32
    %c0_i32_0 = arith.constant 0 : i32
    %c0_i32_1 = arith.constant 0 : i32
    return %c0_i32, %c0_i32_0 : i32, i32
  }
  func.func @transform_2(%arg0: i32) -> (i32, i32) {
    %c0_i32 = arith.constant 0 : i32
    %c0_i32_0 = arith.constant 0 : i32
    %c0_i32_1 = arith.constant 0 : i32
    return %c0_i32, %c0_i32_0 : i32, i32
  }
  func.func @transform_3(%arg0: i32) -> (i32, i32) {
    %c0_i32 = arith.constant 0 : i32
    %c0_i32_0 = arith.constant 0 : i32
    return %arg0, %c0_i32 : i32, i32
  }
}

module attributes {stable_mosaic.version = 11 : i64} {
  func.func @_affine_res_act_kernel(%arg0: i32, %arg1: memref<256x128xbf16, #tpu.memory_space<vmem>>, %arg2: memref<1x128xf32, #tpu.memory_space<vmem>>, %arg3: memref<1x128xf32, #tpu.memory_space<vmem>>, %arg4: memref<256x128xbf16, #tpu.memory_space<vmem>>, %arg5: memref<256x128xbf16, #tpu.memory_space<vmem>>) attributes {dimension_semantics = [#tpu.dimension_semantics<parallel>], iteration_bounds = array<i64: 2>, scalar_prefetch = 0 : i64, scratch_operands = 0 : i64, tpu.core_type = #tpu.core_type<tc>, window_params = [{transform_indices = @transform_0, window_bounds = array<i64: 256, 128>}, {pipeline_mode = #tpu.pipeline_mode<synchronous>, transform_indices = @transform_1, window_bounds = array<i64: 1, 128>}, {pipeline_mode = #tpu.pipeline_mode<synchronous>, transform_indices = @transform_2, window_bounds = array<i64: 1, 128>}, {transform_indices = @transform_3, window_bounds = array<i64: 256, 128>}, {transform_indices = @transform_4, window_bounds = array<i64: 256, 128>}]} {
    %c0 = arith.constant 0 : index
    %c0_0 = arith.constant 0 : index
    %0 = vector.load %arg1[%c0, %c0_0] : memref<256x128xbf16, #tpu.memory_space<vmem>>, vector<256x128xbf16>
    %1 = arith.extf %0 : vector<256x128xbf16> to vector<256x128xf32>
    %c0_1 = arith.constant 0 : index
    %c0_2 = arith.constant 0 : index
    %2 = vector.load %arg2[%c0_1, %c0_2] : memref<1x128xf32, #tpu.memory_space<vmem>>, vector<1x128xf32>
    %3 = vector.broadcast %2 : vector<1x128xf32> to vector<256x128xf32>
    %4 = arith.mulf %1, %3 : vector<256x128xf32>
    %c0_3 = arith.constant 0 : index
    %c0_4 = arith.constant 0 : index
    %5 = vector.load %arg3[%c0_3, %c0_4] : memref<1x128xf32, #tpu.memory_space<vmem>>, vector<1x128xf32>
    %6 = vector.broadcast %5 : vector<1x128xf32> to vector<256x128xf32>
    %7 = arith.addf %4, %6 : vector<256x128xf32>
    %c0_5 = arith.constant 0 : index
    %c0_6 = arith.constant 0 : index
    %8 = vector.load %arg4[%c0_5, %c0_6] : memref<256x128xbf16, #tpu.memory_space<vmem>>, vector<256x128xbf16>
    %9 = arith.extf %8 : vector<256x128xbf16> to vector<256x128xf32>
    %10 = arith.addf %7, %9 : vector<256x128xf32>
    %cst = arith.constant 0.000000e+00 : f32
    %11 = vector.broadcast %cst : f32 to vector<256x128xf32>
    %12 = arith.maximumf %10, %11 : vector<256x128xf32>
    %13 = arith.truncf %12 : vector<256x128xf32> to vector<256x128xbf16>
    %c0_7 = arith.constant 0 : index
    %c0_8 = arith.constant 0 : index
    %14 = vector.load %arg5[%c0_7, %c0_8] : memref<256x128xbf16, #tpu.memory_space<vmem>>, vector<256x128xbf16>
    tpu.vector_store %arg5[%c0_7, %c0_8], %13 {strides = array<i32>} : memref<256x128xbf16, #tpu.memory_space<vmem>>, vector<256x128xbf16>,
    return
  }
  func.func @transform_0(%arg0: i32) -> (i32, i32) {
    %c0_i32 = arith.constant 0 : i32
    %c0_i32_0 = arith.constant 0 : i32
    return %arg0, %c0_i32 : i32, i32
  }
  func.func @transform_1(%arg0: i32) -> (i32, i32) {
    %c0_i32 = arith.constant 0 : i32
    %c0_i32_0 = arith.constant 0 : i32
    %c0_i32_1 = arith.constant 0 : i32
    return %c0_i32, %c0_i32_0 : i32, i32
  }
  func.func @transform_2(%arg0: i32) -> (i32, i32) {
    %c0_i32 = arith.constant 0 : i32
    %c0_i32_0 = arith.constant 0 : i32
    %c0_i32_1 = arith.constant 0 : i32
    return %c0_i32, %c0_i32_0 : i32, i32
  }
  func.func @transform_3(%arg0: i32) -> (i32, i32) {
    %c0_i32 = arith.constant 0 : i32
    %c0_i32_0 = arith.constant 0 : i32
    return %arg0, %c0_i32 : i32, i32
  }
  func.func @transform_4(%arg0: i32) -> (i32, i32) {
    %c0_i32 = arith.constant 0 : i32
    %c0_i32_0 = arith.constant 0 : i32
    return %arg0, %c0_i32 : i32, i32
  }
}

</mosaic_0001>

<llo_original>
// kernel: decoder_group_forward.18
$region0: #{decoder_group_forward.18}
  #allocation0 [shape = 'u32[]', space=smem, size = 0x4, offset = 0x4, fixed_abs, tag = 'smem constant byte address 0x4 - core index']
  #allocation1 [shape = 'u32[144,128]{1,0:T(1,128)}', space=vmem, size = 0x12000, scoped, tag = 'internal scratch']
  %s0 = inlined_call_operand.vmem [shape: bf16[128,128], index: 0, kind: input, shape index: {}]
  %s1 = inlined_call_operand.vmem [shape: f32[1,128], index: 1, kind: input, shape index: {}]
  %s2 = inlined_call_operand.vmem [shape: f32[1,128], index: 2, kind: input, shape index: {}]
  %s3 = inlined_call_operand.vmem [shape: bf16[128,128], index: 3, kind: output, shape index: {}]
  %s4 = sld [smem:[#allocation0]]
  $region45: #{decoder_group_forward.18} parent=0
    _
  %s6 = ssub.s32 1, %s4
  %s7 = scalar_select 0, %s6, %s4
  loop: start=0, step=1, limit=4
  $region2: #{decoder_group_forward.18} parent=0 // loop_pre_header
    _
  $region3: #{decoder_group_forward.18} parent=0 // loop_header
    %s9 = sphi 0, %s13
    %p10 = scmp.ge.s32.totalorder %s9, 4
    %s19 = sphi 0, %s21
    %s22 = sphi 0, %s19
    %s23 = sphi 0, %s22
    %s39 = sphi 0, %s23
    %s43 = sphi 0, %s43
    %s45 = sphi 0, %s43
    %s46 = sphi 0, %s45
    %s60 = sphi 0, %s46
    %s64 = sphi 0, %s64
    %s66 = sphi 0, %s64
    %s67 = sphi 0, %s66
    %s81 = sphi 0, %s67
    %s87 = sphi 0, %s89
    %s90 = sphi 0, %s87
    %s91 = sphi 0, %s90
    %s107 = sphi 0, %s91
  $region4: #{decoder_group_forward.18} parent=0 // loop_header_branch
    %12 = sbr.rel (%p10) target = $region8
  $region5: #{decoder_group_forward.18} parent=0 // loop_body
    %s14 = ssub.s32 %s9, 1
    %s15 = ssub.s32 %s9, 2
    %s16 = sadd.s32 %s9, 1
    %s17 = ssub.s32 %s9, %s16
    %p18 = scmp.eq.s32.totalorder %s17, 0
    %s20 = sadd.s32 %s19, 1
    %s21 = scalar_select %p18, %s19, %s20
    %p24 = pneg %p18
    %p25 = scmp.eq.s32.totalorder %s9, 1
    %p26 = por %p24, %p25
    %p27 = scmp.ne.s32.totalorder %s19, %s22
    %p28 = scmp.eq.s32.totalorder %s9, 0
    %p29 = por %p27, %p28
    %p30 = scmp.ne.s32.totalorder %s19, %s22
    %p31 = scmp.eq.s32.totalorder %s14, 1
    %p32 = por %p30, %p31
    %p33 = scmp.ne.s32.totalorder %s22, %s23
    %p34 = scmp.eq.s32.totalorder %s14, 0
    %p35 = por %p33, %p34
    %p36 = scmp.ne.s32.totalorder %s22, %s23
    %p37 = scmp.eq.s32.totalorder %s15, 1
    %p38 = por %p36, %p37
    %p40 = scmp.ne.s32.totalorder %s23, %s39
    %p41 = scmp.eq.s32.totalorder %s15, 0
    %p42 = por %p40, %p41
    %s44 = sadd.s32 %s43, 1
    %p47 = scmp.eq.s32.totalorder %s9, 1
    %p48 = scmp.ne.s32.totalorder %s43, %s45
    %p49 = scmp.eq.s32.totalorder %s9, 0
    %p50 = por %p48, %p49
    %p51 = scmp.ne.s32.totalorder %s43, %s45
    %p52 = scmp.eq.s32.totalorder %s14, 1
    %p53 = por %p51, %p52
    %p54 = scmp.ne.s32.totalorder %s45, %s46
    %p55 = scmp.eq.s32.totalorder %s14, 0
    %p56 = por %p54, %p55
    %p57 = scmp.ne.s32.totalorder %s45, %s46
    %p58 = scmp.eq.s32.totalorder %s15, 1
    %p59 = por %p57, %p58
    %p61 = scmp.ne.s32.totalorder %s46, %s60
    %p62 = scmp.eq.s32.totalorder %s15, 0
    %p63 = por %p61, %p62
    %s65 = sadd.s32 %s64, 1
    %p68 = scmp.eq.s32.totalorder %s9, 1
    %p69 = scmp.ne.s32.totalorder %s64, %s66
    %p70 = scmp.eq.s32.totalorder %s9, 0
    %p71 = por %p69, %p70
    %p72 = scmp.ne.s32.totalorder %s64, %s66
    %p73 = scmp.eq.s32.totalorder %s14, 1
    %p74 = por %p72, %p73
    %p75 = scmp.ne.s32.totalorder %s66, %s67
    %p76 = scmp.eq.s32.totalorder %s14, 0
    %p77 = por %p75, %p76
    %p78 = scmp.ne.s32.totalorder %s66, %s67
    %p79 = scmp.eq.s32.totalorder %s15, 1
    %p80 = por %p78, %p79
    %p82 = scmp.ne.s32.totalorder %s67, %s81
    %p83 = scmp.eq.s32.totalorder %s15, 0
    %p84 = por %p82, %p83
    %s85 = ssub.s32 %s9, %s16
    %p86 = scmp.eq.s32.totalorder %s85, 0
    %s88 = sadd.s32 %s87, 1
    %s89 = scalar_select %p86, %s87, %s88
    %p92 = pneg %p86
    %p93 = scmp.eq.s32.totalorder %s9, 1
    %p94 = por %p92, %p93
    %p95 = scmp.ne.s32.totalorder %s87, %s90
    %p96 = scmp.eq.s32.totalorder %s9, 0
    %p97 = por %p95, %p96
    %p98 = scmp.ne.s32.totalorder %s87, %s90
    %p99 = scmp.eq.s32.totalorder %s14, 1
    %p100 = por %p98, %p99
    %p101 = scmp.ne.s32.totalorder %s90, %s91
    %p102 = scmp.eq.s32.totalorder %s14, 0
    %p103 = por %p101, %p102
    %p104 = scmp.ne.s32.totalorder %s90, %s91
    %p105 = scmp.eq.s32.totalorder %s15, 1
    %p106 = por %p104, %p105
    %p108 = scmp.ne.s32.totalorder %s91, %s107
    %p109 = scmp.eq.s32.totalorder %s15, 0
    %p110 = por %p108, %p109
    %p111 = scmp.le.s32.totalorder 1, %s9
    %p112 = scmp.lt.s32.totalorder %s9, 3
    %p113 = pnand %p111, %p112
    %p114 = pneg %p113
    // Predicated region
    $region9: #{decoder_group_forward.18} parent=5 // pred_check
      _
    $region10: #{decoder_group_forward.18} parent=5 // pred_check_branch
      %116 = sbr.rel (%p113) target = $region12
    $region11: #{decoder_group_forward.18} parent=5 // pred_region
      %s117 = ssub.s32 %s9, 1
      // Predicated region
      $region13: #{decoder_group_forward.18} parent=11 // pred_check
        %p118 = pneg %p56
      $region14: #{decoder_group_forward.18} parent=11 // pred_check_branch
        %120 = sbr.rel (%p118) target = $region16
      $region15: #{decoder_group_forward.18} parent=11 // pred_region
        _
      $region16: #{decoder_group_forward.18} parent=11 // pred_fallthru
        _
      // Predicated region
      $region17: #{decoder_group_forward.18} parent=11 // pred_check
        %p121 = pneg %p77
      $region18: #{decoder_group_forward.18} parent=11 // pred_check_branch
        %123 = sbr.rel (%p121) target = $region20
      $region19: #{decoder_group_forward.18} parent=11 // pred_region
        _
      $region20: #{decoder_group_forward.18} parent=11 // pred_fallthru
        _
    $region12: #{decoder_group_forward.18} parent=5 // pred_fallthru
      _
    %p124 = scmp.lt.s32.totalorder %s9, 2
    // Predicated region
    $region21: #{decoder_group_forward.18} parent=5 // pred_check
      %p125 = pneg %p124
    $region22: #{decoder_group_forward.18} parent=5 // pred_check_branch
      %127 = sbr.rel (%p125) target = $region24
    $region23: #{decoder_group_forward.18} parent=5 // pred_region
      // Predicated region
      $region25: #{decoder_group_forward.18} parent=23 // pred_check
        %p128 = pneg %p29
      $region26: #{decoder_group_forward.18} parent=23 // pred_check_branch
        %130 = sbr.rel (%p128) target = $region28
      $region27: #{decoder_group_forward.18} parent=23 // pred_region
        %s131 = smul.u32 8, %s9
        %p132 = scmp.lt.s32.totalorder %s131, 15
        %s133 = scalar_select %p132, %s131, 15
        %s134 = smul.addr %s133, 4
        %s135 = scalar_lea.vmem %s0, %s134
        %s136 = smul.u32 8, %s9
      $region28: #{decoder_group_forward.18} parent=23 // pred_fallthru
        _
    $region24: #{decoder_group_forward.18} parent=5 // pred_fallthru
      _
    %p137 = scmp.le.s32.totalorder 1, %s9
    %p138 = scmp.lt.s32.totalorder %s9, 3
    %p139 = pnand %p137, %p138
    %p140 = pneg %p139
    // Predicated region
    $region29: #{decoder_group_forward.18} parent=5 // pred_check
      _
    $region30: #{decoder_group_forward.18} parent=5 // pred_check_branch
      %142 = sbr.rel (%p139) target = $region32
    $region31: #{decoder_group_forward.18} parent=5 // pred_region
      %s143 = ssub.s32 %s9, 1
      %s144 = smul.u32 8, %s14
      %p145 = scmp.lt.s32.totalorder %s144, 15
      %s146 = scalar_select %p145, %s144, 15
      %s147 = smul.addr %s146, 4
      %s148 = scalar_lea.vmem %s0, %s147
      %p149 = pneg %p35
      %p150 = pneg %p32
      %p151 = pneg %p56
      %p152 = pneg %p53
      %p153 = pneg %p77
      %p154 = pneg %p74
      %p155 = pneg %p103
      %p156 = pneg %p100
      %s157 = smul.u32 8, %s14
      %p158 = scmp.lt.s32.totalorder %s157, 15
      %s159 = scalar_select %p158, %s157, 15
      %s160 = smul.addr %s159, 4
      %s161 = scalar_lea.vmem %s3, %s160
      %s162 = smul.u32 8, %s14
      %p163 = scmp.lt.s32.totalorder %s162, 15
      %s164 = scalar_select %p163, %s162, 15
      %s165 = smul.addr %s164, 4
      %s166 = scalar_lea.vmem %s0, %s165
      %s167 = smul.u32 8, %s14
      %s168 = smul.u32 8, %s14
      %p169 = scmp.lt.s32.totalorder %s168, 15
      %s170 = scalar_select %p169, %s168, 15
      %s171 = smul.addr %s170, 4
      %s172 = scalar_lea.vmem %s3, %s171
      %s173 = smul.u32 8, %s14
      %v174 = vld [vmem:[%s166] sm:$0xf]
      %v175 = vld [vmem:[%s166 + $0x4] sm:$0xf]
      %v176 = vld [vmem:[%s166 + $0x8] sm:$0xf]
      %v177 = vld [vmem:[%s166 + $0xc] sm:$0xf]
      %v178 = vld [vmem:[%s166 + $0x10] sm:$0xf]
      %v179 = vld [vmem:[%s166 + $0x14] sm:$0xf]
      %v180 = vld [vmem:[%s166 + $0x18] sm:$0xf]
      %v181 = vld [vmem:[%s166 + $0x1c] sm:$0xf]
      %v182 = vunpack.c.l.bf16 %v174
      %v183 = vunpack.c.l.bf16 %v175
      %v184 = vunpack.c.l.bf16 %v176
      %v185 = vunpack.c.l.bf16 %v177
      %v186 = vunpack.c.l.bf16 %v178
      %v187 = vunpack.c.l.bf16 %v179
      %v188 = vunpack.c.l.bf16 %v180
      %v189 = vunpack.c.l.bf16 %v181
      %v190 = vld [vmem:[%s1] sm:$0x1]
      %v192 = vlaneseq
      %v193 = vshrl.u32 %v192, 7
      %v194 = vsub.s32 0, %v193
      %v195 = vrot.slane %v190, %v194
      %v197 = vmul.f32 %v182, %v195
      %v198 = vmul.f32 %v183, %v195
      %v199 = vmul.f32 %v184, %v195
      %v200 = vmul.f32 %v185, %v195
      %v201 = vmul.f32 %v186, %v195
      %v202 = vmul.f32 %v187, %v195
      %v203 = vmul.f32 %v188, %v195
      %v204 = vmul.f32 %v189, %v195
      %v205 = vld [vmem:[%s2] sm:$0x1]
      %v207 = vlaneseq
      %v208 = vshrl.u32 %v207, 7
      %v209 = vsub.s32 0, %v208
      %v210 = vrot.slane %v205, %v209
      %v212 = vadd.f32 %v197, %v210
      %v213 = vadd.f32 %v198, %v210
      %v214 = vadd.f32 %v199, %v210
      %v215 = vadd.f32 %v200, %v210
      %v216 = vadd.f32 %v201, %v210
      %v217 = vadd.f32 %v202, %v210
      %v218 = vadd.f32 %v203, %v210
      %v219 = vadd.f32 %v204, %v210
      %v220 = vmax.f32 %v212, 0.0
      %v221 = vmax.f32 %v213, 0.0
      %v222 = vmax.f32 %v214, 0.0
      %v223 = vmax.f32 %v215, 0.0
      %v224 = vmax.f32 %v216, 0.0
      %v225 = vmax.f32 %v217, 0.0
      %v226 = vmax.f32 %v218, 0.0
      %v227 = vmax.f32 %v219, 0.0
      %v228 = vpack.c.bf16 %v221, %v220
      %v229 = vpack.c.bf16 %v223, %v222
      %v230 = vpack.c.bf16 %v225, %v224
      %v231 = vpack.c.bf16 %v227, %v226
      %v236 = vunpack.c.l.b16 %v228
      %v237 = vunpack.c.h.b16 %v228
      %v238 = vunpack.c.l.b16 %v229
      %v239 = vunpack.c.h.b16 %v229
      %v240 = vunpack.c.l.b16 %v230
      %v241 = vunpack.c.h.b16 %v230
      %v242 = vunpack.c.l.b16 %v231
      %v243 = vunpack.c.h.b16 %v231
      %v244 = vpack.c.b16 %v236, %v236
      %v245 = vpack.c.b16 %v237, %v237
      %v246 = vpack.c.b16 %v238, %v238
      %v247 = vpack.c.b16 %v239, %v239
      %v248 = vpack.c.b16 %v240, %v240
      %v249 = vpack.c.b16 %v241, %v241
      %v250 = vpack.c.b16 %v242, %v242
      %v251 = vpack.c.b16 %v243, %v243
      %260 = vst [vmem:[%s172] sm:$0xf] %v244
      %261 = vst [vmem:[%s172 + $0x4] sm:$0xf] %v245
      %262 = vst [vmem:[%s172 + $0x8] sm:$0xf] %v246
      %263 = vst [vmem:[%s172 + $0xc] sm:$0xf] %v247
      %264 = vst [vmem:[%s172 + $0x10] sm:$0xf] %v248
      %265 = vst [vmem:[%s172 + $0x14] sm:$0xf] %v249
      %266 = vst [vmem:[%s172 + $0x18] sm:$0xf] %v250
      %267 = vst [vmem:[%s172 + $0x1c] sm:$0xf] %v251
      %s268 = smul.u32 8, %s14
      %p269 = scmp.lt.s32.totalorder %s268, 15
      %s270 = scalar_select %p269, %s268, 15
      %s271 = smul.addr %s270, 4
      %s272 = scalar_lea.vmem %s3, %s271
      // Predicated region
      $region33: #{decoder_group_forward.18} parent=31 // pred_check
        %p273 = pneg %p100
      $region34: #{decoder_group_forward.18} parent=31 // pred_check_branch
        %275 = sbr.rel (%p273) target = $region36
      $region35: #{decoder_group_forward.18} parent=31 // pred_region
        %s276 = smul.u32 8, %s14
      $region36: #{decoder_group_forward.18} parent=31 // pred_fallthru
        _
    $region32: #{decoder_group_forward.18} parent=5 // pred_fallthru
      _
    %p277 = scmp.le.s32.totalorder 2, %s9
    // Predicated region
    $region37: #{decoder_group_forward.18} parent=5 // pred_check
      %p278 = pneg %p277
    $region38: #{decoder_group_forward.18} parent=5 // pred_check_branch
      %280 = sbr.rel (%p278) target = $region40
    $region39: #{decoder_group_forward.18} parent=5 // pred_region
      %s281 = ssub.s32 %s9, 2
      // Predicated region
      $region41: #{decoder_group_forward.18} parent=39 // pred_check
        %p282 = pneg %p106
      $region42: #{decoder_group_forward.18} parent=39 // pred_check_branch
        %284 = sbr.rel (%p282) target = $region44
      $region43: #{decoder_group_forward.18} parent=39 // pred_region
        %s285 = smul.u32 8, %s15
        %p286 = scmp.lt.s32.totalorder %s285, 15
        %s287 = scalar_select %p286, %s285, 15
        %s288 = smul.addr %s287, 4
        %s289 = scalar_lea.vmem %s3, %s288
      $region44: #{decoder_group_forward.18} parent=39 // pred_fallthru
        _
    $region40: #{decoder_group_forward.18} parent=5 // pred_fallthru
      _
  $region6: #{decoder_group_forward.18} parent=0 // loop_footer
    %s13 = sadd.s32 1, %s9
  $region7: #{decoder_group_forward.18} parent=0 // loop_footer_branch
    %8 = sbr.rel target = $region3
  $region8: #{decoder_group_forward.18} parent=0 // loop_exit
    _

// kernel: decoder_group_forward.22
$region0: #{decoder_group_forward.22}
  #allocation0 [shape = 'u32[]', space=smem, size = 0x4, offset = 0x4, fixed_abs, tag = 'smem constant byte address 0x4 - core index']
  #allocation1 [shape = 'u32[144,128]{1,0:T(1,128)}', space=vmem, size = 0x12000, scoped, tag = 'internal scratch']
  %s0 = inlined_call_operand.vmem [shape: bf16[128,128], index: 0, kind: input, shape index: {}]
  %s1 = inlined_call_operand.vmem [shape: f32[1,128], index: 1, kind: input, shape index: {}]
  %s2 = inlined_call_operand.vmem [shape: f32[1,128], index: 2, kind: input, shape index: {}]
  %s3 = inlined_call_operand.vmem [shape: bf16[128,128], index: 3, kind: input, shape index: {}]
  %s4 = inlined_call_operand.vmem [shape: bf16[128,128], index: 4, kind: output, shape index: {}]
  %s5 = sld [smem:[#allocation0]]
  $region49: #{decoder_group_forward.22} parent=0
    _
  %s7 = ssub.s32 1, %s5
  %s8 = scalar_select 0, %s7, %s5
  loop: start=0, step=1, limit=4
  $region2: #{decoder_group_forward.22} parent=0 // loop_pre_header
    _
  $region3: #{decoder_group_forward.22} parent=0 // loop_header
    %s10 = sphi 0, %s14
    %p11 = scmp.ge.s32.totalorder %s10, 4
    %s20 = sphi 0, %s22
    %s23 = sphi 0, %s20
    %s24 = sphi 0, %s23
    %s40 = sphi 0, %s24
    %s44 = sphi 0, %s44
    %s46 = sphi 0, %s44
    %s47 = sphi 0, %s46
    %s61 = sphi 0, %s47
    %s65 = sphi 0, %s65
    %s67 = sphi 0, %s65
    %s68 = sphi 0, %s67
    %s82 = sphi 0, %s68
    %s88 = sphi 0, %s90
    %s91 = sphi 0, %s88
    %s92 = sphi 0, %s91
    %s108 = sphi 0, %s92
    %s114 = sphi 0, %s116
    %s117 = sphi 0, %s114
    %s118 = sphi 0, %s117
    %s134 = sphi 0, %s118
  $region4: #{decoder_group_forward.22} parent=0 // loop_header_branch
    %13 = sbr.rel (%p11) target = $region8
  $region5: #{decoder_group_forward.22} parent=0 // loop_body
    %s15 = ssub.s32 %s10, 1
    %s16 = ssub.s32 %s10, 2
    %s17 = sadd.s32 %s10, 1
    %s18 = ssub.s32 %s10, %s17
    %p19 = scmp.eq.s32.totalorder %s18, 0
    %s21 = sadd.s32 %s20, 1
    %s22 = scalar_select %p19, %s20, %s21
    %p25 = pneg %p19
    %p26 = scmp.eq.s32.totalorder %s10, 1
    %p27 = por %p25, %p26
    %p28 = scmp.ne.s32.totalorder %s20, %s23
    %p29 = scmp.eq.s32.totalorder %s10, 0
    %p30 = por %p28, %p29
    %p31 = scmp.ne.s32.totalorder %s20, %s23
    %p32 = scmp.eq.s32.totalorder %s15, 1
    %p33 = por %p31, %p32
    %p34 = scmp.ne.s32.totalorder %s23, %s24
    %p35 = scmp.eq.s32.totalorder %s15, 0
    %p36 = por %p34, %p35
    %p37 = scmp.ne.s32.totalorder %s23, %s24
    %p38 = scmp.eq.s32.totalorder %s16, 1
    %p39 = por %p37, %p38
    %p41 = scmp.ne.s32.totalorder %s24, %s40
    %p42 = scmp.eq.s32.totalorder %s16, 0
    %p43 = por %p41, %p42
    %s45 = sadd.s32 %s44, 1
    %p48 = scmp.eq.s32.totalorder %s10, 1
    %p49 = scmp.ne.s32.totalorder %s44, %s46
    %p50 = scmp.eq.s32.totalorder %s10, 0
    %p51 = por %p49, %p50
    %p52 = scmp.ne.s32.totalorder %s44, %s46
    %p53 = scmp.eq.s32.totalorder %s15, 1
    %p54 = por %p52, %p53
    %p55 = scmp.ne.s32.totalorder %s46, %s47
    %p56 = scmp.eq.s32.totalorder %s15, 0
    %p57 = por %p55, %p56
    %p58 = scmp.ne.s32.totalorder %s46, %s47
    %p59 = scmp.eq.s32.totalorder %s16, 1
    %p60 = por %p58, %p59
    %p62 = scmp.ne.s32.totalorder %s47, %s61
    %p63 = scmp.eq.s32.totalorder %s16, 0
    %p64 = por %p62, %p63
    %s66 = sadd.s32 %s65, 1
    %p69 = scmp.eq.s32.totalorder %s10, 1
    %p70 = scmp.ne.s32.totalorder %s65, %s67
    %p71 = scmp.eq.s32.totalorder %s10, 0
    %p72 = por %p70, %p71
    %p73 = scmp.ne.s32.totalorder %s65, %s67
    %p74 = scmp.eq.s32.totalorder %s15, 1
    %p75 = por %p73, %p74
    %p76 = scmp.ne.s32.totalorder %s67, %s68
    %p77 = scmp.eq.s32.totalorder %s15, 0
    %p78 = por %p76, %p77
    %p79 = scmp.ne.s32.totalorder %s67, %s68
    %p80 = scmp.eq.s32.totalorder %s16, 1
    %p81 = por %p79, %p80
    %p83 = scmp.ne.s32.totalorder %s68, %s82
    %p84 = scmp.eq.s32.totalorder %s16, 0
    %p85 = por %p83, %p84
    %s86 = ssub.s32 %s10, %s17
    %p87 = scmp.eq.s32.totalorder %s86, 0
    %s89 = sadd.s32 %s88, 1
    %s90 = scalar_select %p87, %s88, %s89
    %p93 = pneg %p87
    %p94 = scmp.eq.s32.totalorder %s10, 1
    %p95 = por %p93, %p94
    %p96 = scmp.ne.s32.totalorder %s88, %s91
    %p97 = scmp.eq.s32.totalorder %s10, 0
    %p98 = por %p96, %p97
    %p99 = scmp.ne.s32.totalorder %s88, %s91
    %p100 = scmp.eq.s32.totalorder %s15, 1
    %p101 = por %p99, %p100
    %p102 = scmp.ne.s32.totalorder %s91, %s92
    %p103 = scmp.eq.s32.totalorder %s15, 0
    %p104 = por %p102, %p103
    %p105 = scmp.ne.s32.totalorder %s91, %s92
    %p106 = scmp.eq.s32.totalorder %s16, 1
    %p107 = por %p105, %p106
    %p109 = scmp.ne.s32.totalorder %s92, %s108
    %p110 = scmp.eq.s32.totalorder %s16, 0
    %p111 = por %p109, %p110
    %s112 = ssub.s32 %s10, %s17
    %p113 = scmp.eq.s32.totalorder %s112, 0
    %s115 = sadd.s32 %s114, 1
    %s116 = scalar_select %p113, %s114, %s115
    %p119 = pneg %p113
    %p120 = scmp.eq.s32.totalorder %s10, 1
    %p121 = por %p119, %p120
    %p122 = scmp.ne.s32.totalorder %s114, %s117
    %p123 = scmp.eq.s32.totalorder %s10, 0
    %p124 = por %p122, %p123
    %p125 = scmp.ne.s32.totalorder %s114, %s117
    %p126 = scmp.eq.s32.totalorder %s15, 1
    %p127 = por %p125, %p126
    %p128 = scmp.ne.s32.totalorder %s117, %s118
    %p129 = scmp.eq.s32.totalorder %s15, 0
    %p130 = por %p128, %p129
    %p131 = scmp.ne.s32.totalorder %s117, %s118
    %p132 = scmp.eq.s32.totalorder %s16, 1
    %p133 = por %p131, %p132
    %p135 = scmp.ne.s32.totalorder %s118, %s134
    %p136 = scmp.eq.s32.totalorder %s16, 0
    %p137 = por %p135, %p136
    %p138 = scmp.le.s32.totalorder 1, %s10
    %p139 = scmp.lt.s32.totalorder %s10, 3
    %p140 = pnand %p138, %p139
    %p141 = pneg %p140
    // Predicated region
    $region9: #{decoder_group_forward.22} parent=5 // pred_check
      _
    $region10: #{decoder_group_forward.22} parent=5 // pred_check_branch
      %143 = sbr.rel (%p140) target = $region12
    $region11: #{decoder_group_forward.22} parent=5 // pred_region
      %s144 = ssub.s32 %s10, 1
      // Predicated region
      $region13: #{decoder_group_forward.22} parent=11 // pred_check
        %p145 = pneg %p57
      $region14: #{decoder_group_forward.22} parent=11 // pred_check_branch
        %147 = sbr.rel (%p145) target = $region16
      $region15: #{decoder_group_forward.22} parent=11 // pred_region
        _
      $region16: #{decoder_group_forward.22} parent=11 // pred_fallthru
        _
      // Predicated region
      $region17: #{decoder_group_forward.22} parent=11 // pred_check
        %p148 = pneg %p78
      $region18: #{decoder_group_forward.22} parent=11 // pred_check_branch
        %150 = sbr.rel (%p148) target = $region20
      $region19: #{decoder_group_forward.22} parent=11 // pred_region
        _
      $region20: #{decoder_group_forward.22} parent=11 // pred_fallthru
        _
    $region12: #{decoder_group_forward.22} parent=5 // pred_fallthru
      _
    %p151 = scmp.lt.s32.totalorder %s10, 2
    // Predicated region
    $region21: #{decoder_group_forward.22} parent=5 // pred_check
      %p152 = pneg %p151
    $region22: #{decoder_group_forward.22} parent=5 // pred_check_branch
      %154 = sbr.rel (%p152) target = $region24
    $region23: #{decoder_group_forward.22} parent=5 // pred_region
      // Predicated region
      $region25: #{decoder_group_forward.22} parent=23 // pred_check
        %p155 = pneg %p30
      $region26: #{decoder_group_forward.22} parent=23 // pred_check_branch
        %157 = sbr.rel (%p155) target = $region28
      $region27: #{decoder_group_forward.22} parent=23 // pred_region
        %s158 = smul.u32 8, %s10
        %p159 = scmp.lt.s32.totalorder %s158, 15
        %s160 = scalar_select %p159, %s158, 15
        %s161 = smul.addr %s160, 4
        %s162 = scalar_lea.vmem %s0, %s161
        %s163 = smul.u32 8, %s10
      $region28: #{decoder_group_forward.22} parent=23 // pred_fallthru
        _
      // Predicated region
      $region29: #{decoder_group_forward.22} parent=23 // pred_check
        %p164 = pneg %p98
      $region30: #{decoder_group_forward.22} parent=23 // pred_check_branch
        %166 = sbr.rel (%p164) target = $region32
      $region31: #{decoder_group_forward.22} parent=23 // pred_region
        %s167 = smul.u32 8, %s10
        %p168 = scmp.lt.s32.totalorder %s167, 15
        %s169 = scalar_select %p168, %s167, 15
        %s170 = smul.addr %s169, 4
        %s171 = scalar_lea.vmem %s3, %s170
        %s172 = smul.u32 8, %s10
      $region32: #{decoder_group_forward.22} parent=23 // pred_fallthru
        _
    $region24: #{decoder_group_forward.22} parent=5 // pred_fallthru
      _
    %p173 = scmp.le.s32.totalorder 1, %s10
    %p174 = scmp.lt.s32.totalorder %s10, 3
    %p175 = pnand %p173, %p174
    %p176 = pneg %p175
    // Predicated region
    $region33: #{decoder_group_forward.22} parent=5 // pred_check
      _
    $region34: #{decoder_group_forward.22} parent=5 // pred_check_branch
      %178 = sbr.rel (%p175) target = $region36
    $region35: #{decoder_group_forward.22} parent=5 // pred_region
      %s179 = ssub.s32 %s10, 1
      %s180 = smul.u32 8, %s15
      %p181 = scmp.lt.s32.totalorder %s180, 15
      %s182 = scalar_select %p181, %s180, 15
      %s183 = smul.addr %s182, 4
      %s184 = scalar_lea.vmem %s0, %s183
      %p185 = pneg %p36
      %p186 = pneg %p33
      %p187 = pneg %p57
      %p188 = pneg %p54
      %p189 = pneg %p78
      %p190 = pneg %p75
      %s191 = smul.u32 8, %s15
      %p192 = scmp.lt.s32.totalorder %s191, 15
      %s193 = scalar_select %p192, %s191, 15
      %s194 = smul.addr %s193, 4
      %s195 = scalar_lea.vmem %s3, %s194
      %p196 = pneg %p104
      %p197 = pneg %p101
      %p198 = pneg %p130
      %p199 = pneg %p127
      %s200 = smul.u32 8, %s15
      %p201 = scmp.lt.s32.totalorder %s200, 15
      %s202 = scalar_select %p201, %s200, 15
      %s203 = smul.addr %s202, 4
      %s204 = scalar_lea.vmem %s4, %s203
      %s205 = smul.u32 8, %s15
      %p206 = scmp.lt.s32.totalorder %s205, 15
      %s207 = scalar_select %p206, %s205, 15
      %s208 = smul.addr %s207, 4
      %s209 = scalar_lea.vmem %s0, %s208
      %s210 = smul.u32 8, %s15
      %s211 = smul.u32 8, %s15
      %p212 = scmp.lt.s32.totalorder %s211, 15
      %s213 = scalar_select %p212, %s211, 15
      %s214 = smul.addr %s213, 4
      %s215 = scalar_lea.vmem %s3, %s214
      %s216 = smul.u32 8, %s15
      %s217 = smul.u32 8, %s15
      %p218 = scmp.lt.s32.totalorder %s217, 15
      %s219 = scalar_select %p218, %s217, 15
      %s220 = smul.addr %s219, 4
      %s221 = scalar_lea.vmem %s4, %s220
      %s222 = smul.u32 8, %s15
      %v223 = vld [vmem:[%s209] sm:$0xf]
      %v224 = vld [vmem:[%s209 + $0x4] sm:$0xf]
      %v225 = vld [vmem:[%s209 + $0x8] sm:$0xf]
      %v226 = vld [vmem:[%s209 + $0xc] sm:$0xf]
      %v227 = vld [vmem:[%s209 + $0x10] sm:$0xf]
      %v228 = vld [vmem:[%s209 + $0x14] sm:$0xf]
      %v229 = vld [vmem:[%s209 + $0x18] sm:$0xf]
      %v230 = vld [vmem:[%s209 + $0x1c] sm:$0xf]
      %v231 = vunpack.c.l.bf16 %v223
      %v232 = vunpack.c.l.bf16 %v224
      %v233 = vunpack.c.l.bf16 %v225
      %v234 = vunpack.c.l.bf16 %v226
      %v235 = vunpack.c.l.bf16 %v227
      %v236 = vunpack.c.l.bf16 %v228
      %v237 = vunpack.c.l.bf16 %v229
      %v238 = vunpack.c.l.bf16 %v230
      %v239 = vld [vmem:[%s1] sm:$0x1]
      %v241 = vlaneseq
      %v242 = vshrl.u32 %v241, 7
      %v243 = vsub.s32 0, %v242
      %v244 = vrot.slane %v239, %v243
      %v246 = vmul.f32 %v231, %v244
      %v247 = vmul.f32 %v232, %v244
      %v248 = vmul.f32 %v233, %v244
      %v249 = vmul.f32 %v234, %v244
      %v250 = vmul.f32 %v235, %v244
      %v251 = vmul.f32 %v236, %v244
      %v252 = vmul.f32 %v237, %v244
      %v253 = vmul.f32 %v238, %v244
      %v254 = vld [vmem:[%s2] sm:$0x1]
      %v256 = vlaneseq
      %v257 = vshrl.u32 %v256, 7
      %v258 = vsub.s32 0, %v257
      %v259 = vrot.slane %v254, %v258
      %v261 = vadd.f32 %v246, %v259
      %v262 = vadd.f32 %v247, %v259
      %v263 = vadd.f32 %v248, %v259
      %v264 = vadd.f32 %v249, %v259
      %v265 = vadd.f32 %v250, %v259
      %v266 = vadd.f32 %v251, %v259
      %v267 = vadd.f32 %v252, %v259
      %v268 = vadd.f32 %v253, %v259
      %v269 = vld [vmem:[%s215] sm:$0xf]
      %v270 = vld [vmem:[%s215 + $0x4] sm:$0xf]
      %v271 = vld [vmem:[%s215 + $0x8] sm:$0xf]
      %v272 = vld [vmem:[%s215 + $0xc] sm:$0xf]
      %v273 = vld [vmem:[%s215 + $0x10] sm:$0xf]
      %v274 = vld [vmem:[%s215 + $0x14] sm:$0xf]
      %v275 = vld [vmem:[%s215 + $0x18] sm:$0xf]
      %v276 = vld [vmem:[%s215 + $0x1c] sm:$0xf]
      %v277 = vunpack.c.l.bf16 %v269
      %v278 = vunpack.c.l.bf16 %v270
      %v279 = vunpack.c.l.bf16 %v271
      %v280 = vunpack.c.l.bf16 %v272
      %v281 = vunpack.c.l.bf16 %v273
      %v282 = vunpack.c.l.bf16 %v274
      %v283 = vunpack.c.l.bf16 %v275
      %v284 = vunpack.c.l.bf16 %v276
      %v285 = vadd.f32 %v261, %v277
      %v286 = vadd.f32 %v262, %v278
      %v287 = vadd.f32 %v263, %v279
      %v288 = vadd.f32 %v264, %v280
      %v289 = vadd.f32 %v265, %v281
      %v290 = vadd.f32 %v266, %v282
      %v291 = vadd.f32 %v267, %v283
      %v292 = vadd.f32 %v268, %v284
      %v293 = vmax.f32 %v285, 0.0
      %v294 = vmax.f32 %v286, 0.0
      %v295 = vmax.f32 %v287, 0.0
      %v296 = vmax.f32 %v288, 0.0
      %v297 = vmax.f32 %v289, 0.0
      %v298 = vmax.f32 %v290, 0.0
      %v299 = vmax.f32 %v291, 0.0
      %v300 = vmax.f32 %v292, 0.0
      %v301 = vpack.c.bf16 %v294, %v293
      %v302 = vpack.c.bf16 %v296, %v295
      %v303 = vpack.c.bf16 %v298, %v297
      %v304 = vpack.c.bf16 %v300, %v299
      %v309 = vunpack.c.l.b16 %v301
      %v310 = vunpack.c.h.b16 %v301
      %v311 = vunpack.c.l.b16 %v302
      %v312 = vunpack.c.h.b16 %v302
      %v313 = vunpack.c.l.b16 %v303
      %v314 = vunpack.c.h.b16 %v303
      %v315 = vunpack.c.l.b16 %v304
      %v316 = vunpack.c.h.b16 %v304
      %v317 = vpack.c.b16 %v309, %v309
      %v318 = vpack.c.b16 %v310, %v310
      %v319 = vpack.c.b16 %v311, %v311
      %v320 = vpack.c.b16 %v312, %v312
      %v321 = vpack.c.b16 %v313, %v313
      %v322 = vpack.c.b16 %v314, %v314
      %v323 = vpack.c.b16 %v315, %v315
      %v324 = vpack.c.b16 %v316, %v316
      %333 = vst [vmem:[%s221] sm:$0xf] %v317
      %334 = vst [vmem:[%s221 + $0x4] sm:$0xf] %v318
      %335 = vst [vmem:[%s221 + $0x8] sm:$0xf] %v319
      %336 = vst [vmem:[%s221 + $0xc] sm:$0xf] %v320
      %337 = vst [vmem:[%s221 + $0x10] sm:$0xf] %v321
      %338 = vst [vmem:[%s221 + $0x14] sm:$0xf] %v322
      %339 = vst [vmem:[%s221 + $0x18] sm:$0xf] %v323
      %340 = vst [vmem:[%s221 + $0x1c] sm:$0xf] %v324
      %s341 = smul.u32 8, %s15
      %p342 = scmp.lt.s32.totalorder %s341, 15
      %s343 = scalar_select %p342, %s341, 15
      %s344 = smul.addr %s343, 4
      %s345 = scalar_lea.vmem %s4, %s344
      // Predicated region
      $region37: #{decoder_group_forward.22} parent=35 // pred_check
        %p346 = pneg %p127
      $region38: #{decoder_group_forward.22} parent=35 // pred_check_branch
        %348 = sbr.rel (%p346) target = $region40
      $region39: #{decoder_group_forward.22} parent=35 // pred_region
        %s349 = smul.u32 8, %s15
      $region40: #{decoder_group_forward.22} parent=35 // pred_fallthru
        _
    $region36: #{decoder_group_forward.22} parent=5 // pred_fallthru
      _
    %p350 = scmp.le.s32.totalorder 2, %s10
    // Predicated region
    $region41: #{decoder_group_forward.22} parent=5 // pred_check
      %p351 = pneg %p350
    $region42: #{decoder_group_forward.22} parent=5 // pred_check_branch
      %353 = sbr.rel (%p351) target = $region44
    $region43: #{decoder_group_forward.22} parent=5 // pred_region
      %s354 = ssub.s32 %s10, 2
      // Predicated region
      $region45: #{decoder_group_forward.22} parent=43 // pred_check
        %p355 = pneg %p133
      $region46: #{decoder_group_forward.22} parent=43 // pred_check_branch
        %357 = sbr.rel (%p355) target = $region48
      $region47: #{decoder_group_forward.22} parent=43 // pred_region
        %s358 = smul.u32 8, %s16
        %p359 = scmp.lt.s32.totalorder %s358, 15
        %s360 = scalar_select %p359, %s358, 15
        %s361 = smul.addr %s360, 4
        %s362 = scalar_lea.vmem %s4, %s361
      $region48: #{decoder_group_forward.22} parent=43 // pred_fallthru
        _
    $region44: #{decoder_group_forward.22} parent=5 // pred_fallthru
      _
  $region6: #{decoder_group_forward.22} parent=0 // loop_footer
    %s14 = sadd.s32 1, %s10
  $region7: #{decoder_group_forward.22} parent=0 // loop_footer_branch
    %9 = sbr.rel target = $region3
  $region8: #{decoder_group_forward.22} parent=0 // loop_exit
    _

// kernel: decoder_group_forward.17
$region0: #{decoder_group_forward.17}
  #allocation0 [shape = 'u32[]', space=smem, size = 0x4, offset = 0x4, fixed_abs, tag = 'smem constant byte address 0x4 - core index']
  #allocation1 [shape = 'u32[144,128]{1,0:T(1,128)}', space=vmem, size = 0x12000, scoped, tag = 'internal scratch']
  %s0 = inlined_call_operand.vmem [shape: bf16[128,128], index: 0, kind: input, shape index: {}]
  %s1 = inlined_call_operand.vmem [shape: bf16[128,128], index: 1, kind: input, shape index: {}]
  %s2 = inlined_call_operand.vmem [shape: bf16[128,128], index: 2, kind: output, shape index: {0}]
  %s3 = inlined_call_operand.vmem [shape: f32[16,128], index: 3, kind: output, shape index: {1}]
  %4 = xla_tuple %s2, %s3
  %s5 = sld [smem:[#allocation0]]
  $region49: #{decoder_group_forward.17} parent=0
    _
  %s7 = ssub.s32 1, %s5
  %s8 = scalar_select 0, %s7, %s5
  loop: start=0, step=1, limit=4
  $region2: #{decoder_group_forward.17} parent=0 // loop_pre_header
    _
  $region3: #{decoder_group_forward.17} parent=0 // loop_header
    %s10 = sphi 0, %s14
    %p11 = scmp.ge.s32.totalorder %s10, 4
    %s20 = sphi 0, %s22
    %s23 = sphi 0, %s20
    %s24 = sphi 0, %s23
    %s40 = sphi 0, %s24
    %s44 = sphi 0, %s44
    %s46 = sphi 0, %s44
    %s47 = sphi 0, %s46
    %s61 = sphi 0, %s47
    %s67 = sphi 0, %s69
    %s70 = sphi 0, %s67
    %s71 = sphi 0, %s70
    %s87 = sphi 0, %s71
    %s93 = sphi 0, %s95
    %s96 = sphi 0, %s93
    %s97 = sphi 0, %s96
    %s113 = sphi 0, %s97
  $region4: #{decoder_group_forward.17} parent=0 // loop_header_branch
    %13 = sbr.rel (%p11) target = $region8
  $region5: #{decoder_group_forward.17} parent=0 // loop_body
    %s15 = ssub.s32 %s10, 1
    %s16 = ssub.s32 %s10, 2
    %s17 = sadd.s32 %s10, 1
    %s18 = ssub.s32 %s10, %s17
    %p19 = scmp.eq.s32.totalorder %s18, 0
    %s21 = sadd.s32 %s20, 1
    %s22 = scalar_select %p19, %s20, %s21
    %p25 = pneg %p19
    %p26 = scmp.eq.s32.totalorder %s10, 1
    %p27 = por %p25, %p26
    %p28 = scmp.ne.s32.totalorder %s20, %s23
    %p29 = scmp.eq.s32.totalorder %s10, 0
    %p30 = por %p28, %p29
    %p31 = scmp.ne.s32.totalorder %s20, %s23
    %p32 = scmp.eq.s32.totalorder %s15, 1
    %p33 = por %p31, %p32
    %p34 = scmp.ne.s32.totalorder %s23, %s24
    %p35 = scmp.eq.s32.totalorder %s15, 0
    %p36 = por %p34, %p35
    %p37 = scmp.ne.s32.totalorder %s23, %s24
    %p38 = scmp.eq.s32.totalorder %s16, 1
    %p39 = por %p37, %p38
    %p41 = scmp.ne.s32.totalorder %s24, %s40
    %p42 = scmp.eq.s32.totalorder %s16, 0
    %p43 = por %p41, %p42
    %s45 = sadd.s32 %s44, 1
    %p48 = scmp.eq.s32.totalorder %s10, 1
    %p49 = scmp.ne.s32.totalorder %s44, %s46
    %p50 = scmp.eq.s32.totalorder %s10, 0
    %p51 = por %p49, %p50
    %p52 = scmp.ne.s32.totalorder %s44, %s46
    %p53 = scmp.eq.s32.totalorder %s15, 1
    %p54 = por %p52, %p53
    %p55 = scmp.ne.s32.totalorder %s46, %s47
    %p56 = scmp.eq.s32.totalorder %s15, 0
    %p57 = por %p55, %p56
    %p58 = scmp.ne.s32.totalorder %s46, %s47
    %p59 = scmp.eq.s32.totalorder %s16, 1
    %p60 = por %p58, %p59
    %p62 = scmp.ne.s32.totalorder %s47, %s61
    %p63 = scmp.eq.s32.totalorder %s16, 0
    %p64 = por %p62, %p63
    %s65 = ssub.s32 %s10, %s17
    %p66 = scmp.eq.s32.totalorder %s65, 0
    %s68 = sadd.s32 %s67, 1
    %s69 = scalar_select %p66, %s67, %s68
    %p72 = pneg %p66
    %p73 = scmp.eq.s32.totalorder %s10, 1
    %p74 = por %p72, %p73
    %p75 = scmp.ne.s32.totalorder %s67, %s70
    %p76 = scmp.eq.s32.totalorder %s10, 0
    %p77 = por %p75, %p76
    %p78 = scmp.ne.s32.totalorder %s67, %s70
    %p79 = scmp.eq.s32.totalorder %s15, 1
    %p80 = por %p78, %p79
    %p81 = scmp.ne.s32.totalorder %s70, %s71
    %p82 = scmp.eq.s32.totalorder %s15, 0
    %p83 = por %p81, %p82
    %p84 = scmp.ne.s32.totalorder %s70, %s71
    %p85 = scmp.eq.s32.totalorder %s16, 1
    %p86 = por %p84, %p85
    %p88 = scmp.ne.s32.totalorder %s71, %s87
    %p89 = scmp.eq.s32.totalorder %s16, 0
    %p90 = por %p88, %p89
    %s91 = ssub.s32 %s10, %s17
    %p92 = scmp.eq.s32.totalorder %s91, 0
    %s94 = sadd.s32 %s93, 1
    %s95 = scalar_select %p92, %s93, %s94
    %p98 = pneg %p92
    %p99 = scmp.eq.s32.totalorder %s10, 1
    %p100 = por %p98, %p99
    %p101 = scmp.ne.s32.totalorder %s93, %s96
    %p102 = scmp.eq.s32.totalorder %s10, 0
    %p103 = por %p101, %p102
    %p104 = scmp.ne.s32.totalorder %s93, %s96
    %p105 = scmp.eq.s32.totalorder %s15, 1
    %p106 = por %p104, %p105
    %p107 = scmp.ne.s32.totalorder %s96, %s97
    %p108 = scmp.eq.s32.totalorder %s15, 0
    %p109 = por %p107, %p108
    %p110 = scmp.ne.s32.totalorder %s96, %s97
    %p111 = scmp.eq.s32.totalorder %s16, 1
    %p112 = por %p110, %p111
    %p114 = scmp.ne.s32.totalorder %s97, %s113
    %p115 = scmp.eq.s32.totalorder %s16, 0
    %p116 = por %p114, %p115
    %p117 = scmp.le.s32.totalorder 1, %s10
    %p118 = scmp.lt.s32.totalorder %s10, 3
    %p119 = pnand %p117, %p118
    %p120 = pneg %p119
    // Predicated region
    $region9: #{decoder_group_forward.17} parent=5 // pred_check
      _
    $region10: #{decoder_group_forward.17} parent=5 // pred_check_branch
      %122 = sbr.rel (%p119) target = $region12
    $region11: #{decoder_group_forward.17} parent=5 // pred_region
      %s123 = ssub.s32 %s10, 1
      // Predicated region
      $region13: #{decoder_group_forward.17} parent=11 // pred_check
        %p124 = pneg %p57
      $region14: #{decoder_group_forward.17} parent=11 // pred_check_branch
        %126 = sbr.rel (%p124) target = $region16
      $region15: #{decoder_group_forward.17} parent=11 // pred_region
        _
      $region16: #{decoder_group_forward.17} parent=11 // pred_fallthru
        _
    $region12: #{decoder_group_forward.17} parent=5 // pred_fallthru
      _
    %p127 = scmp.lt.s32.totalorder %s10, 2
    // Predicated region
    $region17: #{decoder_group_forward.17} parent=5 // pred_check
      %p128 = pneg %p127
    $region18: #{decoder_group_forward.17} parent=5 // pred_check_branch
      %130 = sbr.rel (%p128) target = $region20
    $region19: #{decoder_group_forward.17} parent=5 // pred_region
      // Predicated region
      $region21: #{decoder_group_forward.17} parent=19 // pred_check
        %p131 = pneg %p30
      $region22: #{decoder_group_forward.17} parent=19 // pred_check_branch
        %133 = sbr.rel (%p131) target = $region24
      $region23: #{decoder_group_forward.17} parent=19 // pred_region
        %s134 = smul.u32 8, %s10
        %p135 = scmp.lt.s32.totalorder %s134, 15
        %s136 = scalar_select %p135, %s134, 15
        %s137 = smul.addr %s136, 4
        %s138 = scalar_lea.vmem %s0, %s137
        %s139 = smul.u32 8, %s10
      $region24: #{decoder_group_forward.17} parent=19 // pred_fallthru
        _
    $region20: #{decoder_group_forward.17} parent=5 // pred_fallthru
      _
    %p140 = scmp.le.s32.totalorder 1, %s10
    %p141 = scmp.lt.s32.totalorder %s10, 3
    %p142 = pnand %p140, %p141
    %p143 = pneg %p142
    // Predicated region
    $region25: #{decoder_group_forward.17} parent=5 // pred_check
      _
    $region26: #{decoder_group_forward.17} parent=5 // pred_check_branch
      %145 = sbr.rel (%p142) target = $region28
    $region27: #{decoder_group_forward.17} parent=5 // pred_region
      %s146 = ssub.s32 %s10, 1
      %s147 = smul.u32 8, %s15
      %p148 = scmp.lt.s32.totalorder %s147, 15
      %s149 = scalar_select %p148, %s147, 15
      %s150 = smul.addr %s149, 4
      %s151 = scalar_lea.vmem %s0, %s150
      %p152 = pneg %p36
      %p153 = pneg %p33
      %p154 = pneg %p57
      %p155 = pneg %p54
      %p156 = pneg %p83
      %p157 = pneg %p80
      %s158 = smul.u32 8, %s15
      %p159 = scmp.lt.s32.totalorder %s158, 15
      %s160 = scalar_select %p159, %s158, 15
      %s161 = smul.addr %s160, 4
      %s162 = scalar_lea.vmem %s2, %s161
      %p163 = pneg %p109
      %p164 = pneg %p106
      %p165 = scmp.lt.s32.totalorder %s15, 1
      %s166 = scalar_select %p165, %s15, 1
      %s167 = smul.addr %s166, 8
      %s168 = scalar_lea.vmem %s3, %s167
      %s169 = smul.u32 8, %s15
      %p170 = scmp.lt.s32.totalorder %s169, 15
      %s171 = scalar_select %p170, %s169, 15
      %s172 = smul.addr %s171, 4
      %s173 = scalar_lea.vmem %s0, %s172
      %s174 = smul.u32 8, %s15
      %s175 = smul.u32 8, %s15
      %p176 = scmp.lt.s32.totalorder %s175, 15
      %s177 = scalar_select %p176, %s175, 15
      %s178 = smul.addr %s177, 4
      %s179 = scalar_lea.vmem %s2, %s178
      %s180 = smul.u32 8, %s15
      %p181 = scmp.lt.s32.totalorder %s15, 1
      %s182 = scalar_select %p181, %s15, 1
      %s183 = smul.addr %s182, 8
      %s184 = scalar_lea.vmem %s3, %s183
      %v186 = vld [vmem:[%s173] sm:$0xf]
      %v187 = vld [vmem:[%s173 + $0x4] sm:$0xf]
      %v188 = vld [vmem:[%s173 + $0x8] sm:$0xf]
      %v189 = vld [vmem:[%s173 + $0xc] sm:$0xf]
      %v190 = vld [vmem:[%s173 + $0x10] sm:$0xf]
      %v191 = vld [vmem:[%s173 + $0x14] sm:$0xf]
      %v192 = vld [vmem:[%s173 + $0x18] sm:$0xf]
      %v193 = vld [vmem:[%s173 + $0x1c] sm:$0xf]
      %v194 = vld [vmem:[%s1] sm:$0xf]
      %v195 = vld [vmem:[%s1 + $0x4] sm:$0xf]
      %v196 = vld [vmem:[%s1 + $0x8] sm:$0xf]
      %v197 = vld [vmem:[%s1 + $0xc] sm:$0xf]
      %v198 = vld [vmem:[%s1 + $0x10] sm:$0xf]
      %v199 = vld [vmem:[%s1 + $0x14] sm:$0xf]
      %v200 = vld [vmem:[%s1 + $0x18] sm:$0xf]
      %v201 = vld [vmem:[%s1 + $0x1c] sm:$0xf]
      %v202 = vld [vmem:[%s1 + $0x20] sm:$0xf]
      %v203 = vld [vmem:[%s1 + $0x24] sm:$0xf]
      %v204 = vld [vmem:[%s1 + $0x28] sm:$0xf]
      %v205 = vld [vmem:[%s1 + $0x2c] sm:$0xf]
      %v206 = vld [vmem:[%s1 + $0x30] sm:$0xf]
      %v207 = vld [vmem:[%s1 + $0x34] sm:$0xf]
      %v208 = vld [vmem:[%s1 + $0x38] sm:$0xf]
      %v209 = vld [vmem:[%s1 + $0x3c] sm:$0xf]
      %v218 = vunpack.c.l.b16 %v186
      %v219 = vunpack.c.l.b16 %v187
      %v220 = vunpack.c.l.b16 %v188
      %v221 = vunpack.c.l.b16 %v189
      %v222 = vunpack.c.l.b16 %v190
      %v223 = vunpack.c.l.b16 %v191
      %v224 = vunpack.c.l.b16 %v192
      %v225 = vunpack.c.l.b16 %v193
      %v226 = vpack.c.b16 %v219, %v218
      %v227 = vpack.c.b16 %v221, %v220
      %v228 = vpack.c.b16 %v223, %v222
      %v229 = vpack.c.b16 %v225, %v224
      %v250 = vunpack.c.l.b16 %v194
      %v251 = vunpack.c.l.b16 %v195
      %v252 = vunpack.c.l.b16 %v196
      %v253 = vunpack.c.l.b16 %v197
      %v254 = vunpack.c.l.b16 %v198
      %v255 = vunpack.c.l.b16 %v199
      %v256 = vunpack.c.l.b16 %v200
      %v257 = vunpack.c.l.b16 %v201
      %v258 = vunpack.c.l.b16 %v202
      %v259 = vunpack.c.l.b16 %v203
      %v260 = vunpack.c.l.b16 %v204
      %v261 = vunpack.c.l.b16 %v205
      %v262 = vunpack.c.l.b16 %v206
      %v263 = vunpack.c.l.b16 %v207
      %v264 = vunpack.c.l.b16 %v208
      %v265 = vunpack.c.l.b16 %v209
      %v266 = vpack.c.b16 %v251, %v250
      %v267 = vpack.c.b16 %v253, %v252
      %v268 = vpack.c.b16 %v255, %v254
      %v269 = vpack.c.b16 %v257, %v256
      %v270 = vpack.c.b16 %v259, %v258
      %v271 = vpack.c.b16 %v261, %v260
      %v272 = vpack.c.b16 %v263, %v262
      %v273 = vpack.c.b16 %v265, %v264
      %282 = vmatprep.subr.bf16.mxu0 0
      %283 = vmatpush1.bf16.msra.mxu0 %v266
      %284 = vmatprep.subr.bf16.mxu0 0
      %285 = vmatpush1.bf16.msra.mxu0 %v267
      %286 = vmatprep.subr.bf16.mxu0 0
      %287 = vmatpush1.bf16.msra.mxu0 %v268
      %288 = vmatprep.subr.bf16.mxu0 0
      %289 = vmatpush1.bf16.msra.mxu0 %v269
      %290 = vmatprep.subr.bf16.mxu0 0
      %291 = vmatpush1.bf16.msra.mxu0 %v270
      %292 = vmatprep.subr.bf16.mxu0 0
      %293 = vmatpush1.bf16.msra.mxu0 %v271
      %294 = vmatprep.subr.bf16.mxu0 0
      %295 = vmatpush1.bf16.msra.mxu0 %v272
      %296 = vmatprep.subr.bf16.mxu0 0
      %297 = vmatpush1.bf16.msra.mxu0 %v273
      %298 = vmatprep.subr.bf16.mxu0 0
      %299 = vmatpush1.bf16.msra.mxu0 0
      %300 = vmatprep.subr.bf16.mxu0 0
      %301 = vmatpush1.bf16.msra.mxu0 0
      %302 = vmatprep.subr.bf16.mxu0 0
      %303 = vmatpush1.bf16.msra.mxu0 0
      %304 = vmatprep.subr.bf16.mxu0 0
      %305 = vmatpush1.bf16.msra.mxu0 0
      %306 = vmatprep.subr.bf16.mxu0 0
      %307 = vmatpush1.bf16.msra.mxu0 0
      %308 = vmatprep.subr.bf16.mxu0 0
      %309 = vmatpush1.bf16.msra.mxu0 0
      %310 = vmatprep.subr.bf16.mxu0 0
      %311 = vmatpush1.bf16.msra.mxu0 0
      %312 = vmatprep.subr.bf16.mxu0 0
      %313 = vmatpush1.bf16.msra.mxu0 0
      %314 = vmatprep.mubr.bf16.mxu0 0
      %315 = vmatmul.mubr.bf16.gmra.mrb[0].mxu0 %v226
      %v316 = vpop.f32.mrb[0].mxu0
      %v317 = vadd.f32 0.0, %v316
      %v318 = vpop.f32.mrb[0].mxu0
      %v319 = vpop.f32.mrb[0].mxu0
      %v320 = vadd.f32 0.0, %v319
      %v321 = vpop.f32.mrb[0].mxu0
      %322 = vmatprep.mubr.bf16.mxu0 0
      %323 = vmatmul.mubr.bf16.gmra.mrb[0].mxu0 %v227
      %v324 = vpop.f32.mrb[0].mxu0
      %v325 = vadd.f32 0.0, %v324
      %v326 = vpop.f32.mrb[0].mxu0
      %v327 = vpop.f32.mrb[0].mxu0
      %v328 = vadd.f32 0.0, %v327
      %v329 = vpop.f32.mrb[0].mxu0
      %330 = vmatprep.mubr.bf16.mxu0 0
      %331 = vmatmul.mubr.bf16.gmra.mrb[0].mxu0 %v228
      %v332 = vpop.f32.mrb[0].mxu0
      %v333 = vadd.f32 0.0, %v332
      %v334 = vpop.f32.mrb[0].mxu0
      %v335 = vpop.f32.mrb[0].mxu0
      %v336 = vadd.f32 0.0, %v335
      %v337 = vpop.f32.mrb[0].mxu0
      %338 = vmatprep.mubr.bf16.mxu0 0
      %339 = vmatmul.mubr.bf16.gmra.mrb[0].mxu0 %v229
      %v340 = vpop.f32.mrb[0].mxu0
      %v341 = vadd.f32 0.0, %v340
      %v342 = vpop.f32.mrb[0].mxu0
      %v343 = vpop.f32.mrb[0].mxu0
      %v344 = vadd.f32 0.0, %v343
      %v345 = vpop.f32.mrb[0].mxu0
      %346 = vdwg.mxu0
      %v347 = vpack.c.bf16 %v320, %v317
      %v348 = vpack.c.bf16 %v328, %v325
      %v349 = vpack.c.bf16 %v336, %v333
      %v350 = vpack.c.bf16 %v344, %v341
      %v355 = vunpack.c.l.b16 %v347
      %v356 = vunpack.c.h.b16 %v347
      %v357 = vunpack.c.l.b16 %v348
      %v358 = vunpack.c.h.b16 %v348
      %v359 = vunpack.c.l.b16 %v349
      %v360 = vunpack.c.h.b16 %v349
      %v361 = vunpack.c.l.b16 %v350
      %v362 = vunpack.c.h.b16 %v350
      %v363 = vpack.c.b16 %v355, %v355
      %v364 = vpack.c.b16 %v356, %v356
      %v365 = vpack.c.b16 %v357, %v357
      %v366 = vpack.c.b16 %v358, %v358
      %v367 = vpack.c.b16 %v359, %v359
      %v368 = vpack.c.b16 %v360, %v360
      %v369 = vpack.c.b16 %v361, %v361
      %v370 = vpack.c.b16 %v362, %v362
      %379 = vst [vmem:[%s179] sm:$0xf] %v363
      %380 = vst [vmem:[%s179 + $0x4] sm:$0xf] %v364
      %381 = vst [vmem:[%s179 + $0x8] sm:$0xf] %v365
      %382 = vst [vmem:[%s179 + $0xc] sm:$0xf] %v366
      %383 = vst [vmem:[%s179 + $0x10] sm:$0xf] %v367
      %384 = vst [vmem:[%s179 + $0x14] sm:$0xf] %v368
      %385 = vst [vmem:[%s179 + $0x18] sm:$0xf] %v369
      %386 = vst [vmem:[%s179 + $0x1c] sm:$0xf] %v370
      %v387 = vadd.f32 %v317, %v320
      %v388 = vadd.f32 %v387, %v325
      %v389 = vadd.f32 %v388, %v328
      %v390 = vadd.f32 %v389, %v333
      %v391 = vadd.f32 %v390, %v336
      %v392 = vadd.f32 %v391, %v341
      %v393 = vadd.f32 %v392, %v344
      %v394 = vrot.slane %v393, 4
      %v395 = vadd.f32 %v393, %v394
      %v396 = vrot.slane %v395, 2
      %v397 = vadd.f32 %v395, %v396
      %v398 = vrot.slane %v397, 1
      %v399 = vadd.f32 %v397, %v398
      %400 = vst [vmem:[%s184] sm:$0x1] %v399
      %v401 = vmul.f32 %v317, %v317
      %v402 = vmul.f32 %v320, %v320
      %v403 = vmul.f32 %v325, %v325
      %v404 = vmul.f32 %v328, %v328
      %v405 = vmul.f32 %v333, %v333
      %v406 = vmul.f32 %v336, %v336
      %v407 = vmul.f32 %v341, %v341
      %v408 = vmul.f32 %v344, %v344
      %v409 = vadd.f32 %v401, %v402
      %v410 = vadd.f32 %v409, %v403
      %v411 = vadd.f32 %v410, %v404
      %v412 = vadd.f32 %v411, %v405
      %v413 = vadd.f32 %v412, %v406
      %v414 = vadd.f32 %v413, %v407
      %v415 = vadd.f32 %v414, %v408
      %v416 = vrot.slane %v415, 4
      %v417 = vadd.f32 %v415, %v416
      %v418 = vrot.slane %v417, 2
      %v419 = vadd.f32 %v417, %v418
      %v420 = vrot.slane %v419, 1
      %v421 = vadd.f32 %v419, %v420
      %422 = vst [vmem:[%s184 + $0x1] sm:$0x1] %v421
      %s423 = smul.u32 8, %s15
      %p424 = scmp.lt.s32.totalorder %s423, 15
      %s425 = scalar_select %p424, %s423, 15
      %s426 = smul.addr %s425, 4
      %s427 = scalar_lea.vmem %s2, %s426
      %p428 = scmp.lt.s32.totalorder %s15, 1
      %s429 = scalar_select %p428, %s15, 1
      %s430 = smul.addr %s429, 8
      %s431 = scalar_lea.vmem %s3, %s430
      // Predicated region
      $region29: #{decoder_group_forward.17} parent=27 // pred_check
        %p432 = pneg %p80
      $region30: #{decoder_group_forward.17} parent=27 // pred_check_branch
        %434 = sbr.rel (%p432) target = $region32
      $region31: #{decoder_group_forward.17} parent=27 // pred_region
        %s435 = smul.u32 8, %s15
      $region32: #{decoder_group_forward.17} parent=27 // pred_fallthru
        _
      // Predicated region
      $region33: #{decoder_group_forward.17} parent=27 // pred_check
        %p436 = pneg %p106
      $region34: #{decoder_group_forward.17} parent=27 // pred_check_branch
        %438 = sbr.rel (%p436) target = $region36
      $region35: #{decoder_group_forward.17} parent=27 // pred_region
        _
      $region36: #{decoder_group_forward.17} parent=27 // pred_fallthru
        _
    $region28: #{decoder_group_forward.17} parent=5 // pred_fallthru
      _
    %p439 = scmp.le.s32.totalorder 2, %s10
    // Predicated region
    $region37: #{decoder_group_forward.17} parent=5 // pred_check
      %p440 = pneg %p439
    $region38: #{decoder_group_forward.17} parent=5 // pred_check_branch
      %442 = sbr.rel (%p440) target = $region40
    $region39: #{decoder_group_forward.17} parent=5 // pred_region
      %s443 = ssub.s32 %s10, 2
      // Predicated region
      $region41: #{decoder_group_forward.17} parent=39 // pred_check
        %p444 = pneg %p86
      $region42: #{decoder_group_forward.17} parent=39 // pred_check_branch
        %446 = sbr.rel (%p444) target = $region44
      $region43: #{decoder_group_forward.17} parent=39 // pred_region
        %s447 = smul.u32 8, %s16
        %p448 = scmp.lt.s32.totalorder %s447, 15
        %s449 = scalar_select %p448, %s447, 15
        %s450 = smul.addr %s449, 4
        %s451 = scalar_lea.vmem %s2, %s450
      $region44: #{decoder_group_forward.17} parent=39 // pred_fallthru
        _
      // Predicated region
      $region45: #{decoder_group_forward.17} parent=39 // pred_check
        %p452 = pneg %p112
      $region46: #{decoder_group_forward.17} parent=39 // pred_check_branch
        %454 = sbr.rel (%p452) target = $region48
      $region47: #{decoder_group_forward.17} parent=39 // pred_region
        %p455 = scmp.lt.s32.totalorder %s16, 1
        %s456 = scalar_select %p455, %s16, 1
        %s457 = smul.addr %s456, 8
        %s458 = scalar_lea.vmem %s3, %s457
      $region48: #{decoder_group_forward.17} parent=39 // pred_fallthru
        _
    $region40: #{decoder_group_forward.17} parent=5 // pred_fallthru
      _
  $region6: #{decoder_group_forward.17} parent=0 // loop_footer
    %s14 = sadd.s32 1, %s10
  $region7: #{decoder_group_forward.17} parent=0 // loop_footer_branch
    %9 = sbr.rel target = $region3
  $region8: #{decoder_group_forward.17} parent=0 // loop_exit
    _

// kernel: decoder_group_forward.24
$region0: #{decoder_group_forward.24}
  #allocation0 [shape = 'u32[]', space=smem, size = 0x4, offset = 0x4, fixed_abs, tag = 'smem constant byte address 0x4 - core index']
  #allocation1 [shape = 'u32[144,128]{1,0:T(1,128)}', space=vmem, size = 0x12000, scoped, tag = 'internal scratch']
  %s0 = inlined_call_operand.vmem [shape: bf16[512,128], index: 0, kind: input, shape index: {}]
  %s1 = inlined_call_operand.vmem [shape: f32[1,128], index: 1, kind: input, shape index: {}]
  %s2 = inlined_call_operand.vmem [shape: f32[1,128], index: 2, kind: input, shape index: {}]
  %s3 = inlined_call_operand.vmem [shape: bf16[512,128], index: 3, kind: output, shape index: {}]
  %s4 = sld [smem:[#allocation0]]
  $region45: #{decoder_group_forward.24} parent=0
    _
  %s6 = ssub.s32 1, %s4
  %s7 = scalar_select 0, %s6, %s4
  loop: start=0, step=1, limit=4
  $region2: #{decoder_group_forward.24} parent=0 // loop_pre_header
    _
  $region3: #{decoder_group_forward.24} parent=0 // loop_header
    %s9 = sphi 0, %s13
    %p10 = scmp.ge.s32.totalorder %s9, 4
    %s19 = sphi 0, %s21
    %s22 = sphi 0, %s19
    %s23 = sphi 0, %s22
    %s39 = sphi 0, %s23
    %s43 = sphi 0, %s43
    %s45 = sphi 0, %s43
    %s46 = sphi 0, %s45
    %s60 = sphi 0, %s46
    %s64 = sphi 0, %s64
    %s66 = sphi 0, %s64
    %s67 = sphi 0, %s66
    %s81 = sphi 0, %s67
    %s87 = sphi 0, %s89
    %s90 = sphi 0, %s87
    %s91 = sphi 0, %s90
    %s107 = sphi 0, %s91
  $region4: #{decoder_group_forward.24} parent=0 // loop_header_branch
    %12 = sbr.rel (%p10) target = $region8
  $region5: #{decoder_group_forward.24} parent=0 // loop_body
    %s14 = ssub.s32 %s9, 1
    %s15 = ssub.s32 %s9, 2
    %s16 = sadd.s32 %s9, 1
    %s17 = ssub.s32 %s9, %s16
    %p18 = scmp.eq.s32.totalorder %s17, 0
    %s20 = sadd.s32 %s19, 1
    %s21 = scalar_select %p18, %s19, %s20
    %p24 = pneg %p18
    %p25 = scmp.eq.s32.totalorder %s9, 1
    %p26 = por %p24, %p25
    %p27 = scmp.ne.s32.totalorder %s19, %s22
    %p28 = scmp.eq.s32.totalorder %s9, 0
    %p29 = por %p27, %p28
    %p30 = scmp.ne.s32.totalorder %s19, %s22
    %p31 = scmp.eq.s32.totalorder %s14, 1
    %p32 = por %p30, %p31
    %p33 = scmp.ne.s32.totalorder %s22, %s23
    %p34 = scmp.eq.s32.totalorder %s14, 0
    %p35 = por %p33, %p34
    %p36 = scmp.ne.s32.totalorder %s22, %s23
    %p37 = scmp.eq.s32.totalorder %s15, 1
    %p38 = por %p36, %p37
    %p40 = scmp.ne.s32.totalorder %s23, %s39
    %p41 = scmp.eq.s32.totalorder %s15, 0
    %p42 = por %p40, %p41
    %s44 = sadd.s32 %s43, 1
    %p47 = scmp.eq.s32.totalorder %s9, 1
    %p48 = scmp.ne.s32.totalorder %s43, %s45
    %p49 = scmp.eq.s32.totalorder %s9, 0
    %p50 = por %p48, %p49
    %p51 = scmp.ne.s32.totalorder %s43, %s45
    %p52 = scmp.eq.s32.totalorder %s14, 1
    %p53 = por %p51, %p52
    %p54 = scmp.ne.s32.totalorder %s45, %s46
    %p55 = scmp.eq.s32.totalorder %s14, 0
    %p56 = por %p54, %p55
    %p57 = scmp.ne.s32.totalorder %s45, %s46
    %p58 = scmp.eq.s32.totalorder %s15, 1
    %p59 = por %p57, %p58
    %p61 = scmp.ne.s32.totalorder %s46, %s60
    %p62 = scmp.eq.s32.totalorder %s15, 0
    %p63 = por %p61, %p62
    %s65 = sadd.s32 %s64, 1
    %p68 = scmp.eq.s32.totalorder %s9, 1
    %p69 = scmp.ne.s32.totalorder %s64, %s66
    %p70 = scmp.eq.s32.totalorder %s9, 0
    %p71 = por %p69, %p70
    %p72 = scmp.ne.s32.totalorder %s64, %s66
    %p73 = scmp.eq.s32.totalorder %s14, 1
    %p74 = por %p72, %p73
    %p75 = scmp.ne.s32.totalorder %s66, %s67
    %p76 = scmp.eq.s32.totalorder %s14, 0
    %p77 = por %p75, %p76
    %p78 = scmp.ne.s32.totalorder %s66, %s67
    %p79 = scmp.eq.s32.totalorder %s15, 1
    %p80 = por %p78, %p79
    %p82 = scmp.ne.s32.totalorder %s67, %s81
    %p83 = scmp.eq.s32.totalorder %s15, 0
    %p84 = por %p82, %p83
    %s85 = ssub.s32 %s9, %s16
    %p86 = scmp.eq.s32.totalorder %s85, 0
    %s88 = sadd.s32 %s87, 1
    %s89 = scalar_select %p86, %s87, %s88
    %p92 = pneg %p86
    %p93 = scmp.eq.s32.totalorder %s9, 1
    %p94 = por %p92, %p93
    %p95 = scmp.ne.s32.totalorder %s87, %s90
    %p96 = scmp.eq.s32.totalorder %s9, 0
    %p97 = por %p95, %p96
    %p98 = scmp.ne.s32.totalorder %s87, %s90
    %p99 = scmp.eq.s32.totalorder %s14, 1
    %p100 = por %p98, %p99
    %p101 = scmp.ne.s32.totalorder %s90, %s91
    %p102 = scmp.eq.s32.totalorder %s14, 0
    %p103 = por %p101, %p102
    %p104 = scmp.ne.s32.totalorder %s90, %s91
    %p105 = scmp.eq.s32.totalorder %s15, 1
    %p106 = por %p104, %p105
    %p108 = scmp.ne.s32.totalorder %s91, %s107
    %p109 = scmp.eq.s32.totalorder %s15, 0
    %p110 = por %p108, %p109
    %p111 = scmp.le.s32.totalorder 1, %s9
    %p112 = scmp.lt.s32.totalorder %s9, 3
    %p113 = pnand %p111, %p112
    %p114 = pneg %p113
    // Predicated region
    $region9: #{decoder_group_forward.24} parent=5 // pred_check
      _
    $region10: #{decoder_group_forward.24} parent=5 // pred_check_branch
      %116 = sbr.rel (%p113) target = $region12
    $region11: #{decoder_group_forward.24} parent=5 // pred_region
      %s117 = ssub.s32 %s9, 1
      // Predicated region
      $region13: #{decoder_group_forward.24} parent=11 // pred_check
        %p118 = pneg %p56
      $region14: #{decoder_group_forward.24} parent=11 // pred_check_branch
        %120 = sbr.rel (%p118) target = $region16
      $region15: #{decoder_group_forward.24} parent=11 // pred_region
        _
      $region16: #{decoder_group_forward.24} parent=11 // pred_fallthru
        _
      // Predicated region
      $region17: #{decoder_group_forward.24} parent=11 // pred_check
        %p121 = pneg %p77
      $region18: #{decoder_group_forward.24} parent=11 // pred_check_branch
        %123 = sbr.rel (%p121) target = $region20
      $region19: #{decoder_group_forward.24} parent=11 // pred_region
        _
      $region20: #{decoder_group_forward.24} parent=11 // pred_fallthru
        _
    $region12: #{decoder_group_forward.24} parent=5 // pred_fallthru
      _
    %p124 = scmp.lt.s32.totalorder %s9, 2
    // Predicated region
    $region21: #{decoder_group_forward.24} parent=5 // pred_check
      %p125 = pneg %p124
    $region22: #{decoder_group_forward.24} parent=5 // pred_check_branch
      %127 = sbr.rel (%p125) target = $region24
    $region23: #{decoder_group_forward.24} parent=5 // pred_region
      // Predicated region
      $region25: #{decoder_group_forward.24} parent=23 // pred_check
        %p128 = pneg %p29
      $region26: #{decoder_group_forward.24} parent=23 // pred_check_branch
        %130 = sbr.rel (%p128) target = $region28
      $region27: #{decoder_group_forward.24} parent=23 // pred_region
        %s131 = smul.u32 32, %s9
        %p132 = scmp.lt.s32.totalorder %s131, 63
        %s133 = scalar_select %p132, %s131, 63
        %s134 = smul.addr %s133, 4
        %s135 = scalar_lea.vmem %s0, %s134
        %s136 = smul.u32 32, %s9
      $region28: #{decoder_group_forward.24} parent=23 // pred_fallthru
        _
    $region24: #{decoder_group_forward.24} parent=5 // pred_fallthru
      _
    %p137 = scmp.le.s32.totalorder 1, %s9
    %p138 = scmp.lt.s32.totalorder %s9, 3
    %p139 = pnand %p137, %p138
    %p140 = pneg %p139
    // Predicated region
    $region29: #{decoder_group_forward.24} parent=5 // pred_check
      _
    $region30: #{decoder_group_forward.24} parent=5 // pred_check_branch
      %142 = sbr.rel (%p139) target = $region32
    $region31: #{decoder_group_forward.24} parent=5 // pred_region
      %s143 = ssub.s32 %s9, 1
      %s144 = smul.u32 32, %s14
      %p145 = scmp.lt.s32.totalorder %s144, 63
      %s146 = scalar_select %p145, %s144, 63
      %s147 = smul.addr %s146, 4
      %s148 = scalar_lea.vmem %s0, %s147
      %p149 = pneg %p35
      %p150 = pneg %p32
      %p151 = pneg %p56
      %p152 = pneg %p53
      %p153 = pneg %p77
      %p154 = pneg %p74
      %p155 = pneg %p103
      %p156 = pneg %p100
      %s157 = smul.u32 32, %s14
      %p158 = scmp.lt.s32.totalorder %s157, 63
      %s159 = scalar_select %p158, %s157, 63
      %s160 = smul.addr %s159, 4
      %s161 = scalar_lea.vmem %s3, %s160
      %s162 = smul.u32 32, %s14
      %p163 = scmp.lt.s32.totalorder %s162, 63
      %s164 = scalar_select %p163, %s162, 63
      %s165 = smul.addr %s164, 4
      %s166 = scalar_lea.vmem %s0, %s165
      %s167 = smul.u32 32, %s14
      %s168 = smul.u32 32, %s14
      %p169 = scmp.lt.s32.totalorder %s168, 63
      %s170 = scalar_select %p169, %s168, 63
      %s171 = smul.addr %s170, 4
      %s172 = scalar_lea.vmem %s3, %s171
      %s173 = smul.u32 32, %s14
      %v174 = vld [vmem:[%s166] sm:$0xf]
      %v175 = vld [vmem:[%s166 + $0x4] sm:$0xf]
      %v176 = vld [vmem:[%s166 + $0x8] sm:$0xf]
      %v177 = vld [vmem:[%s166 + $0xc] sm:$0xf]
      %v178 = vld [vmem:[%s166 + $0x10] sm:$0xf]
      %v179 = vld [vmem:[%s166 + $0x14] sm:$0xf]
      %v180 = vld [vmem:[%s166 + $0x18] sm:$0xf]
      %v181 = vld [vmem:[%s166 + $0x1c] sm:$0xf]
      %v182 = vld [vmem:[%s166 + $0x20] sm:$0xf]
      %v183 = vld [vmem:[%s166 + $0x24] sm:$0xf]
      %v184 = vld [vmem:[%s166 + $0x28] sm:$0xf]
      %v185 = vld [vmem:[%s166 + $0x2c] sm:$0xf]
      %v186 = vld [vmem:[%s166 + $0x30] sm:$0xf]
      %v187 = vld [vmem:[%s166 + $0x34] sm:$0xf]
      %v188 = vld [vmem:[%s166 + $0x38] sm:$0xf]
      %v189 = vld [vmem:[%s166 + $0x3c] sm:$0xf]
      %v190 = vld [vmem:[%s166 + $0x40] sm:$0xf]
      %v191 = vld [vmem:[%s166 + $0x44] sm:$0xf]
      %v192 = vld [vmem:[%s166 + $0x48] sm:$0xf]
      %v193 = vld [vmem:[%s166 + $0x4c] sm:$0xf]
      %v194 = vld [vmem:[%s166 + $0x50] sm:$0xf]
      %v195 = vld [vmem:[%s166 + $0x54] sm:$0xf]
      %v196 = vld [vmem:[%s166 + $0x58] sm:$0xf]
      %v197 = vld [vmem:[%s166 + $0x5c] sm:$0xf]
      %v198 = vld [vmem:[%s166 + $0x60] sm:$0xf]
      %v199 = vld [vmem:[%s166 + $0x64] sm:$0xf]
      %v200 = vld [vmem:[%s166 + $0x68] sm:$0xf]
      %v201 = vld [vmem:[%s166 + $0x6c] sm:$0xf]
      %v202 = vld [vmem:[%s166 + $0x70] sm:$0xf]
      %v203 = vld [vmem:[%s166 + $0x74] sm:$0xf]
      %v204 = vld [vmem:[%s166 + $0x78] sm:$0xf]
      %v205 = vld [vmem:[%s166 + $0x7c] sm:$0xf]
      %v206 = vunpack.c.l.bf16 %v174
      %v207 = vunpack.c.l.bf16 %v175
      %v208 = vunpack.c.l.bf16 %v176
      %v209 = vunpack.c.l.bf16 %v177
      %v210 = vunpack.c.l.bf16 %v178
      %v211 = vunpack.c.l.bf16 %v179
      %v212 = vunpack.c.l.bf16 %v180
      %v213 = vunpack.c.l.bf16 %v181
      %v214 = vunpack.c.l.bf16 %v182
      %v215 = vunpack.c.l.bf16 %v183
      %v216 = vunpack.c.l.bf16 %v184
      %v217 = vunpack.c.l.bf16 %v185
      %v218 = vunpack.c.l.bf16 %v186
      %v219 = vunpack.c.l.bf16 %v187
      %v220 = vunpack.c.l.bf16 %v188
      %v221 = vunpack.c.l.bf16 %v189
      %v222 = vunpack.c.l.bf16 %v190
      %v223 = vunpack.c.l.bf16 %v191
      %v224 = vunpack.c.l.bf16 %v192
      %v225 = vunpack.c.l.bf16 %v193
      %v226 = vunpack.c.l.bf16 %v194
      %v227 = vunpack.c.l.bf16 %v195
      %v228 = vunpack.c.l.bf16 %v196
      %v229 = vunpack.c.l.bf16 %v197
      %v230 = vunpack.c.l.bf16 %v198
      %v231 = vunpack.c.l.bf16 %v199
      %v232 = vunpack.c.l.bf16 %v200
      %v233 = vunpack.c.l.bf16 %v201
      %v234 = vunpack.c.l.bf16 %v202
      %v235 = vunpack.c.l.bf16 %v203
      %v236 = vunpack.c.l.bf16 %v204
      %v237 = vunpack.c.l.bf16 %v205
      %v238 = vld [vmem:[%s1] sm:$0x1]
      %v240 = vlaneseq
      %v241 = vshrl.u32 %v240, 7
      %v242 = vsub.s32 0, %v241
      %v243 = vrot.slane %v238, %v242
      %v245 = vmul.f32 %v206, %v243
      %v246 = vmul.f32 %v207, %v243
      %v247 = vmul.f32 %v208, %v243
      %v248 = vmul.f32 %v209, %v243
      %v249 = vmul.f32 %v210, %v243
      %v250 = vmul.f32 %v211, %v243
      %v251 = vmul.f32 %v212, %v243
      %v252 = vmul.f32 %v213, %v243
      %v253 = vmul.f32 %v214, %v243
      %v254 = vmul.f32 %v215, %v243
      %v255 = vmul.f32 %v216, %v243
      %v256 = vmul.f32 %v217, %v243
      %v257 = vmul.f32 %v218, %v243
      %v258 = vmul.f32 %v219, %v243
      %v259 = vmul.f32 %v220, %v243
      %v260 = vmul.f32 %v221, %v243
      %v261 = vmul.f32 %v222, %v243
      %v262 = vmul.f32 %v223, %v243
      %v263 = vmul.f32 %v224, %v243
      %v264 = vmul.f32 %v225, %v243
      %v265 = vmul.f32 %v226, %v243
      %v266 = vmul.f32 %v227, %v243
      %v267 = vmul.f32 %v228, %v243
      %v268 = vmul.f32 %v229, %v243
      %v269 = vmul.f32 %v230, %v243
      %v270 = vmul.f32 %v231, %v243
      %v271 = vmul.f32 %v232, %v243
      %v272 = vmul.f32 %v233, %v243
      %v273 = vmul.f32 %v234, %v243
      %v274 = vmul.f32 %v235, %v243
      %v275 = vmul.f32 %v236, %v243
      %v276 = vmul.f32 %v237, %v243
      %v277 = vld [vmem:[%s2] sm:$0x1]
      %v279 = vlaneseq
      %v280 = vshrl.u32 %v279, 7
      %v281 = vsub.s32 0, %v280
      %v282 = vrot.slane %v277, %v281
      %v284 = vadd.f32 %v245, %v282
      %v285 = vadd.f32 %v246, %v282
      %v286 = vadd.f32 %v247, %v282
      %v287 = vadd.f32 %v248, %v282
      %v288 = vadd.f32 %v249, %v282
      %v289 = vadd.f32 %v250, %v282
      %v290 = vadd.f32 %v251, %v282
      %v291 = vadd.f32 %v252, %v282
      %v292 = vadd.f32 %v253, %v282
      %v293 = vadd.f32 %v254, %v282
      %v294 = vadd.f32 %v255, %v282
      %v295 = vadd.f32 %v256, %v282
      %v296 = vadd.f32 %v257, %v282
      %v297 = vadd.f32 %v258, %v282
      %v298 = vadd.f32 %v259, %v282
      %v299 = vadd.f32 %v260, %v282
      %v300 = vadd.f32 %v261, %v282
      %v301 = vadd.f32 %v262, %v282
      %v302 = vadd.f32 %v263, %v282
      %v303 = vadd.f32 %v264, %v282
      %v304 = vadd.f32 %v265, %v282
      %v305 = vadd.f32 %v266, %v282
      %v306 = vadd.f32 %v267, %v282
      %v307 = vadd.f32 %v268, %v282
      %v308 = vadd.f32 %v269, %v282
      %v309 = vadd.f32 %v270, %v282
      %v310 = vadd.f32 %v271, %v282
      %v311 = vadd.f32 %v272, %v282
      %v312 = vadd.f32 %v273, %v282
      %v313 = vadd.f32 %v274, %v282
      %v314 = vadd.f32 %v275, %v282
      %v315 = vadd.f32 %v276, %v282
      %v316 = vpack.c.bf16 %v285, %v284
      %v317 = vpack.c.bf16 %v287, %v286
      %v318 = vpack.c.bf16 %v289, %v288
      %v319 = vpack.c.bf16 %v291, %v290
      %v320 = vpack.c.bf16 %v293, %v292
      %v321 = vpack.c.bf16 %v295, %v294
      %v322 = vpack.c.bf16 %v297, %v296
      %v323 = vpack.c.bf16 %v299, %v298
      %v324 = vpack.c.bf16 %v301, %v300
      %v325 = vpack.c.bf16 %v303, %v302
      %v326 = vpack.c.bf16 %v305, %v304
      %v327 = vpack.c.bf16 %v307, %v306
      %v328 = vpack.c.bf16 %v309, %v308
      %v329 = vpack.c.bf16 %v311, %v310
      %v330 = vpack.c.bf16 %v313, %v312
      %v331 = vpack.c.bf16 %v315, %v314
      %v348 = vunpack.c.l.b16 %v316
      %v349 = vunpack.c.h.b16 %v316
      %v350 = vunpack.c.l.b16 %v317
      %v351 = vunpack.c.h.b16 %v317
      %v352 = vunpack.c.l.b16 %v318
      %v353 = vunpack.c.h.b16 %v318
      %v354 = vunpack.c.l.b16 %v319
      %v355 = vunpack.c.h.b16 %v319
      %v356 = vunpack.c.l.b16 %v320
      %v357 = vunpack.c.h.b16 %v320
      %v358 = vunpack.c.l.b16 %v321
      %v359 = vunpack.c.h.b16 %v321
      %v360 = vunpack.c.l.b16 %v322
      %v361 = vunpack.c.h.b16 %v322
      %v362 = vunpack.c.l.b16 %v323
      %v363 = vunpack.c.h.b16 %v323
      %v364 = vunpack.c.l.b16 %v324
      %v365 = vunpack.c.h.b16 %v324
      %v366 = vunpack.c.l.b16 %v325
      %v367 = vunpack.c.h.b16 %v325
      %v368 = vunpack.c.l.b16 %v326
      %v369 = vunpack.c.h.b16 %v326
      %v370 = vunpack.c.l.b16 %v327
      %v371 = vunpack.c.h.b16 %v327
      %v372 = vunpack.c.l.b16 %v328
      %v373 = vunpack.c.h.b16 %v328
      %v374 = vunpack.c.l.b16 %v329
      %v375 = vunpack.c.h.b16 %v329
      %v376 = vunpack.c.l.b16 %v330
      %v377 = vunpack.c.h.b16 %v330
      %v378 = vunpack.c.l.b16 %v331
      %v379 = vunpack.c.h.b16 %v331
      %v380 = vpack.c.b16 %v348, %v348
      %v381 = vpack.c.b16 %v349, %v349
      %v382 = vpack.c.b16 %v350, %v350
      %v383 = vpack.c.b16 %v351, %v351
      %v384 = vpack.c.b16 %v352, %v352
      %v385 = vpack.c.b16 %v353, %v353
      %v386 = vpack.c.b16 %v354, %v354
      %v387 = vpack.c.b16 %v355, %v355
      %v388 = vpack.c.b16 %v356, %v356
      %v389 = vpack.c.b16 %v357, %v357
      %v390 = vpack.c.b16 %v358, %v358
      %v391 = vpack.c.b16 %v359, %v359
      %v392 = vpack.c.b16 %v360, %v360
      %v393 = vpack.c.b16 %v361, %v361
      %v394 = vpack.c.b16 %v362, %v362
      %v395 = vpack.c.b16 %v363, %v363
      %v396 = vpack.c.b16 %v364, %v364
      %v397 = vpack.c.b16 %v365, %v365
      %v398 = vpack.c.b16 %v366, %v366
      %v399 = vpack.c.b16 %v367, %v367
      %v400 = vpack.c.b16 %v368, %v368
      %v401 = vpack.c.b16 %v369, %v369
      %v402 = vpack.c.b16 %v370, %v370
      %v403 = vpack.c.b16 %v371, %v371
      %v404 = vpack.c.b16 %v372, %v372
      %v405 = vpack.c.b16 %v373, %v373
      %v406 = vpack.c.b16 %v374, %v374
      %v407 = vpack.c.b16 %v375, %v375
      %v408 = vpack.c.b16 %v376, %v376
      %v409 = vpack.c.b16 %v377, %v377
      %v410 = vpack.c.b16 %v378, %v378
      %v411 = vpack.c.b16 %v379, %v379
      %444 = vst [vmem:[%s172] sm:$0xf] %v380
      %445 = vst [vmem:[%s172 + $0x4] sm:$0xf] %v381
      %446 = vst [vmem:[%s172 + $0x8] sm:$0xf] %v382
      %447 = vst [vmem:[%s172 + $0xc] sm:$0xf] %v383
      %448 = vst [vmem:[%s172 + $0x10] sm:$0xf] %v384
      %449 = vst [vmem:[%s172 + $0x14] sm:$0xf] %v385
      %450 = vst [vmem:[%s172 + $0x18] sm:$0xf] %v386
      %451 = vst [vmem:[%s172 + $0x1c] sm:$0xf] %v387
      %452 = vst [vmem:[%s172 + $0x20] sm:$0xf] %v388
      %453 = vst [vmem:[%s172 + $0x24] sm:$0xf] %v389
      %454 = vst [vmem:[%s172 + $0x28] sm:$0xf] %v390
      %455 = vst [vmem:[%s172 + $0x2c] sm:$0xf] %v391
      %456 = vst [vmem:[%s172 + $0x30] sm:$0xf] %v392
      %457 = vst [vmem:[%s172 + $0x34] sm:$0xf] %v393
      %458 = vst [vmem:[%s172 + $0x38] sm:$0xf] %v394
      %459 = vst [vmem:[%s172 + $0x3c] sm:$0xf] %v395
      %460 = vst [vmem:[%s172 + $0x40] sm:$0xf] %v396
      %461 = vst [vmem:[%s172 + $0x44] sm:$0xf] %v397
      %462 = vst [vmem:[%s172 + $0x48] sm:$0xf] %v398
      %463 = vst [vmem:[%s172 + $0x4c] sm:$0xf] %v399
      %464 = vst [vmem:[%s172 + $0x50] sm:$0xf] %v400
      %465 = vst [vmem:[%s172 + $0x54] sm:$0xf] %v401
      %466 = vst [vmem:[%s172 + $0x58] sm:$0xf] %v402
      %467 = vst [vmem:[%s172 + $0x5c] sm:$0xf] %v403
      %468 = vst [vmem:[%s172 + $0x60] sm:$0xf] %v404
      %469 = vst [vmem:[%s172 + $0x64] sm:$0xf] %v405
      %470 = vst [vmem:[%s172 + $0x68] sm:$0xf] %v406
      %471 = vst [vmem:[%s172 + $0x6c] sm:$0xf] %v407
      %472 = vst [vmem:[%s172 + $0x70] sm:$0xf] %v408
      %473 = vst [vmem:[%s172 + $0x74] sm:$0xf] %v409
      %474 = vst [vmem:[%s172 + $0x78] sm:$0xf] %v410
      %475 = vst [vmem:[%s172 + $0x7c] sm:$0xf] %v411
      %s476 = smul.u32 32, %s14
      %p477 = scmp.lt.s32.totalorder %s476, 63
      %s478 = scalar_select %p477, %s476, 63
      %s479 = smul.addr %s478, 4
      %s480 = scalar_lea.vmem %s3, %s479
      // Predicated region
      $region33: #{decoder_group_forward.24} parent=31 // pred_check
        %p481 = pneg %p100
      $region34: #{decoder_group_forward.24} parent=31 // pred_check_branch
        %483 = sbr.rel (%p481) target = $region36
      $region35: #{decoder_group_forward.24} parent=31 // pred_region
        %s484 = smul.u32 32, %s14
      $region36: #{decoder_group_forward.24} parent=31 // pred_fallthru
        _
    $region32: #{decoder_group_forward.24} parent=5 // pred_fallthru
      _
    %p485 = scmp.le.s32.totalorder 2, %s9
    // Predicated region
    $region37: #{decoder_group_forward.24} parent=5 // pred_check
      %p486 = pneg %p485
    $region38: #{decoder_group_forward.24} parent=5 // pred_check_branch
      %488 = sbr.rel (%p486) target = $region40
    $region39: #{decoder_group_forward.24} parent=5 // pred_region
      %s489 = ssub.s32 %s9, 2
      // Predicated region
      $region41: #{decoder_group_forward.24} parent=39 // pred_check
        %p490 = pneg %p106
      $region42: #{decoder_group_forward.24} parent=39 // pred_check_branch
        %492 = sbr.rel (%p490) target = $region44
      $region43: #{decoder_group_forward.24} parent=39 // pred_region
        %s493 = smul.u32 32, %s15
        %p494 = scmp.lt.s32.totalorder %s493, 63
        %s495 = scalar_select %p494, %s493, 63
        %s496 = smul.addr %s495, 4
        %s497 = scalar_lea.vmem %s3, %s496
      $region44: #{decoder_group_forward.24} parent=39 // pred_fallthru
        _
    $region40: #{decoder_group_forward.24} parent=5 // pred_fallthru
      _
  $region6: #{decoder_group_forward.24} parent=0 // loop_footer
    %s13 = sadd.s32 1, %s9
  $region7: #{decoder_group_forward.24} parent=0 // loop_footer_branch
    %8 = sbr.rel target = $region3
  $region8: #{decoder_group_forward.24} parent=0 // loop_exit
    _

// kernel: decoder_group_forward.33
$region0: #{decoder_group_forward.33}
  #allocation0 [shape = 'u32[]', space=smem, size = 0x4, offset = 0x4, fixed_abs, tag = 'smem constant byte address 0x4 - core index']
  #allocation1 [shape = 'u32[144,128]{1,0:T(1,128)}', space=vmem, size = 0x12000, scoped, tag = 'internal scratch']
  %s0 = inlined_call_operand.vmem [shape: bf16[512,128], index: 0, kind: input, shape index: {}]
  %s1 = inlined_call_operand.vmem [shape: f32[1,128], index: 1, kind: input, shape index: {}]
  %s2 = inlined_call_operand.vmem [shape: f32[1,128], index: 2, kind: input, shape index: {}]
  %s3 = inlined_call_operand.vmem [shape: bf16[512,128], index: 3, kind: input, shape index: {}]
  %s4 = inlined_call_operand.vmem [shape: bf16[512,128], index: 4, kind: output, shape index: {}]
  %s5 = sld [smem:[#allocation0]]
  $region49: #{decoder_group_forward.33} parent=0
    _
  %s7 = ssub.s32 1, %s5
  %s8 = scalar_select 0, %s7, %s5
  loop: start=0, step=1, limit=4
  $region2: #{decoder_group_forward.33} parent=0 // loop_pre_header
    _
  $region3: #{decoder_group_forward.33} parent=0 // loop_header
    %s10 = sphi 0, %s14
    %p11 = scmp.ge.s32.totalorder %s10, 4
    %s20 = sphi 0, %s22
    %s23 = sphi 0, %s20
    %s24 = sphi 0, %s23
    %s40 = sphi 0, %s24
    %s44 = sphi 0, %s44
    %s46 = sphi 0, %s44
    %s47 = sphi 0, %s46
    %s61 = sphi 0, %s47
    %s65 = sphi 0, %s65
    %s67 = sphi 0, %s65
    %s68 = sphi 0, %s67
    %s82 = sphi 0, %s68
    %s88 = sphi 0, %s90
    %s91 = sphi 0, %s88
    %s92 = sphi 0, %s91
    %s108 = sphi 0, %s92
    %s114 = sphi 0, %s116
    %s117 = sphi 0, %s114
    %s118 = sphi 0, %s117
    %s134 = sphi 0, %s118
  $region4: #{decoder_group_forward.33} parent=0 // loop_header_branch
    %13 = sbr.rel (%p11) target = $region8
  $region5: #{decoder_group_forward.33} parent=0 // loop_body
    %s15 = ssub.s32 %s10, 1
    %s16 = ssub.s32 %s10, 2
    %s17 = sadd.s32 %s10, 1
    %s18 = ssub.s32 %s10, %s17
    %p19 = scmp.eq.s32.totalorder %s18, 0
    %s21 = sadd.s32 %s20, 1
    %s22 = scalar_select %p19, %s20, %s21
    %p25 = pneg %p19
    %p26 = scmp.eq.s32.totalorder %s10, 1
    %p27 = por %p25, %p26
    %p28 = scmp.ne.s32.totalorder %s20, %s23
    %p29 = scmp.eq.s32.totalorder %s10, 0
    %p30 = por %p28, %p29
    %p31 = scmp.ne.s32.totalorder %s20, %s23
    %p32 = scmp.eq.s32.totalorder %s15, 1
    %p33 = por %p31, %p32
    %p34 = scmp.ne.s32.totalorder %s23, %s24
    %p35 = scmp.eq.s32.totalorder %s15, 0
    %p36 = por %p34, %p35
    %p37 = scmp.ne.s32.totalorder %s23, %s24
    %p38 = scmp.eq.s32.totalorder %s16, 1
    %p39 = por %p37, %p38
    %p41 = scmp.ne.s32.totalorder %s24, %s40
    %p42 = scmp.eq.s32.totalorder %s16, 0
    %p43 = por %p41, %p42
    %s45 = sadd.s32 %s44, 1
    %p48 = scmp.eq.s32.totalorder %s10, 1
    %p49 = scmp.ne.s32.totalorder %s44, %s46
    %p50 = scmp.eq.s32.totalorder %s10, 0
    %p51 = por %p49, %p50
    %p52 = scmp.ne.s32.totalorder %s44, %s46
    %p53 = scmp.eq.s32.totalorder %s15, 1
    %p54 = por %p52, %p53
    %p55 = scmp.ne.s32.totalorder %s46, %s47
    %p56 = scmp.eq.s32.totalorder %s15, 0
    %p57 = por %p55, %p56
    %p58 = scmp.ne.s32.totalorder %s46, %s47
    %p59 = scmp.eq.s32.totalorder %s16, 1
    %p60 = por %p58, %p59
    %p62 = scmp.ne.s32.totalorder %s47, %s61
    %p63 = scmp.eq.s32.totalorder %s16, 0
    %p64 = por %p62, %p63
    %s66 = sadd.s32 %s65, 1
    %p69 = scmp.eq.s32.totalorder %s10, 1
    %p70 = scmp.ne.s32.totalorder %s65, %s67
    %p71 = scmp.eq.s32.totalorder %s10, 0
    %p72 = por %p70, %p71
    %p73 = scmp.ne.s32.totalorder %s65, %s67
    %p74 = scmp.eq.s32.totalorder %s15, 1
    %p75 = por %p73, %p74
    %p76 = scmp.ne.s32.totalorder %s67, %s68
    %p77 = scmp.eq.s32.totalorder %s15, 0
    %p78 = por %p76, %p77
    %p79 = scmp.ne.s32.totalorder %s67, %s68
    %p80 = scmp.eq.s32.totalorder %s16, 1
    %p81 = por %p79, %p80
    %p83 = scmp.ne.s32.totalorder %s68, %s82
    %p84 = scmp.eq.s32.totalorder %s16, 0
    %p85 = por %p83, %p84
    %s86 = ssub.s32 %s10, %s17
    %p87 = scmp.eq.s32.totalorder %s86, 0
    %s89 = sadd.s32 %s88, 1
    %s90 = scalar_select %p87, %s88, %s89
    %p93 = pneg %p87
    %p94 = scmp.eq.s32.totalorder %s10, 1
    %p95 = por %p93, %p94
    %p96 = scmp.ne.s32.totalorder %s88, %s91
    %p97 = scmp.eq.s32.totalorder %s10, 0
    %p98 = por %p96, %p97
    %p99 = scmp.ne.s32.totalorder %s88, %s91
    %p100 = scmp.eq.s32.totalorder %s15, 1
    %p101 = por %p99, %p100
    %p102 = scmp.ne.s32.totalorder %s91, %s92
    %p103 = scmp.eq.s32.totalorder %s15, 0
    %p104 = por %p102, %p103
    %p105 = scmp.ne.s32.totalorder %s91, %s92
    %p106 = scmp.eq.s32.totalorder %s16, 1
    %p107 = por %p105, %p106
    %p109 = scmp.ne.s32.totalorder %s92, %s108
    %p110 = scmp.eq.s32.totalorder %s16, 0
    %p111 = por %p109, %p110
    %s112 = ssub.s32 %s10, %s17
    %p113 = scmp.eq.s32.totalorder %s112, 0
    %s115 = sadd.s32 %s114, 1
    %s116 = scalar_select %p113, %s114, %s115
    %p119 = pneg %p113
    %p120 = scmp.eq.s32.totalorder %s10, 1
    %p121 = por %p119, %p120
    %p122 = scmp.ne.s32.totalorder %s114, %s117
    %p123 = scmp.eq.s32.totalorder %s10, 0
    %p124 = por %p122, %p123
    %p125 = scmp.ne.s32.totalorder %s114, %s117
    %p126 = scmp.eq.s32.totalorder %s15, 1
    %p127 = por %p125, %p126
    %p128 = scmp.ne.s32.totalorder %s117, %s118
    %p129 = scmp.eq.s32.totalorder %s15, 0
    %p130 = por %p128, %p129
    %p131 = scmp.ne.s32.totalorder %s117, %s118
    %p132 = scmp.eq.s32.totalorder %s16, 1
    %p133 = por %p131, %p132
    %p135 = scmp.ne.s32.totalorder %s118, %s134
    %p136 = scmp.eq.s32.totalorder %s16, 0
    %p137 = por %p135, %p136
    %p138 = scmp.le.s32.totalorder 1, %s10
    %p139 = scmp.lt.s32.totalorder %s10, 3
    %p140 = pnand %p138, %p139
    %p141 = pneg %p140
    // Predicated region
    $region9: #{decoder_group_forward.33} parent=5 // pred_check
      _
    $region10: #{decoder_group_forward.33} parent=5 // pred_check_branch
      %143 = sbr.rel (%p140) target = $region12
    $region11: #{decoder_group_forward.33} parent=5 // pred_region
      %s144 = ssub.s32 %s10, 1
      // Predicated region
      $region13: #{decoder_group_forward.33} parent=11 // pred_check
        %p145 = pneg %p57
      $region14: #{decoder_group_forward.33} parent=11 // pred_check_branch
        %147 = sbr.rel (%p145) target = $region16
      $region15: #{decoder_group_forward.33} parent=11 // pred_region
        _
      $region16: #{decoder_group_forward.33} parent=11 // pred_fallthru
        _
      // Predicated region
      $region17: #{decoder_group_forward.33} parent=11 // pred_check
        %p148 = pneg %p78
      $region18: #{decoder_group_forward.33} parent=11 // pred_check_branch
        %150 = sbr.rel (%p148) target = $region20
      $region19: #{decoder_group_forward.33} parent=11 // pred_region
        _
      $region20: #{decoder_group_forward.33} parent=11 // pred_fallthru
        _
    $region12: #{decoder_group_forward.33} parent=5 // pred_fallthru
      _
    %p151 = scmp.lt.s32.totalorder %s10, 2
    // Predicated region
    $region21: #{decoder_group_forward.33} parent=5 // pred_check
      %p152 = pneg %p151
    $region22: #{decoder_group_forward.33} parent=5 // pred_check_branch
      %154 = sbr.rel (%p152) target = $region24
    $region23: #{decoder_group_forward.33} parent=5 // pred_region
      // Predicated region
      $region25: #{decoder_group_forward.33} parent=23 // pred_check
        %p155 = pneg %p30
      $region26: #{decoder_group_forward.33} parent=23 // pred_check_branch
        %157 = sbr.rel (%p155) target = $region28
      $region27: #{decoder_group_forward.33} parent=23 // pred_region
        %s158 = smul.u32 32, %s10
        %p159 = scmp.lt.s32.totalorder %s158, 63
        %s160 = scalar_select %p159, %s158, 63
        %s161 = smul.addr %s160, 4
        %s162 = scalar_lea.vmem %s0, %s161
        %s163 = smul.u32 32, %s10
      $region28: #{decoder_group_forward.33} parent=23 // pred_fallthru
        _
      // Predicated region
      $region29: #{decoder_group_forward.33} parent=23 // pred_check
        %p164 = pneg %p98
      $region30: #{decoder_group_forward.33} parent=23 // pred_check_branch
        %166 = sbr.rel (%p164) target = $region32
      $region31: #{decoder_group_forward.33} parent=23 // pred_region
        %s167 = smul.u32 32, %s10
        %p168 = scmp.lt.s32.totalorder %s167, 63
        %s169 = scalar_select %p168, %s167, 63
        %s170 = smul.addr %s169, 4
        %s171 = scalar_lea.vmem %s3, %s170
        %s172 = smul.u32 32, %s10
      $region32: #{decoder_group_forward.33} parent=23 // pred_fallthru
        _
    $region24: #{decoder_group_forward.33} parent=5 // pred_fallthru
      _
    %p173 = scmp.le.s32.totalorder 1, %s10
    %p174 = scmp.lt.s32.totalorder %s10, 3
    %p175 = pnand %p173, %p174
    %p176 = pneg %p175
    // Predicated region
    $region33: #{decoder_group_forward.33} parent=5 // pred_check
      _
    $region34: #{decoder_group_forward.33} parent=5 // pred_check_branch
      %178 = sbr.rel (%p175) target = $region36
    $region35: #{decoder_group_forward.33} parent=5 // pred_region
      %s179 = ssub.s32 %s10, 1
      %s180 = smul.u32 32, %s15
      %p181 = scmp.lt.s32.totalorder %s180, 63
      %s182 = scalar_select %p181, %s180, 63
      %s183 = smul.addr %s182, 4
      %s184 = scalar_lea.vmem %s0, %s183
      %p185 = pneg %p36
      %p186 = pneg %p33
      %p187 = pneg %p57
      %p188 = pneg %p54
      %p189 = pneg %p78
      %p190 = pneg %p75
      %s191 = smul.u32 32, %s15
      %p192 = scmp.lt.s32.totalorder %s191, 63
      %s193 = scalar_select %p192, %s191, 63
      %s194 = smul.addr %s193, 4
      %s195 = scalar_lea.vmem %s3, %s194
      %p196 = pneg %p104
      %p197 = pneg %p101
      %p198 = pneg %p130
      %p199 = pneg %p127
      %s200 = smul.u32 32, %s15
      %p201 = scmp.lt.s32.totalorder %s200, 63
      %s202 = scalar_select %p201, %s200, 63
      %s203 = smul.addr %s202, 4
      %s204 = scalar_lea.vmem %s4, %s203
      %s205 = smul.u32 32, %s15
      %p206 = scmp.lt.s32.totalorder %s205, 63
      %s207 = scalar_select %p206, %s205, 63
      %s208 = smul.addr %s207, 4
      %s209 = scalar_lea.vmem %s0, %s208
      %s210 = smul.u32 32, %s15
      %s211 = smul.u32 32, %s15
      %p212 = scmp.lt.s32.totalorder %s211, 63
      %s213 = scalar_select %p212, %s211, 63
      %s214 = smul.addr %s213, 4
      %s215 = scalar_lea.vmem %s3, %s214
      %s216 = smul.u32 32, %s15
      %s217 = smul.u32 32, %s15
      %p218 = scmp.lt.s32.totalorder %s217, 63
      %s219 = scalar_select %p218, %s217, 63
      %s220 = smul.addr %s219, 4
      %s221 = scalar_lea.vmem %s4, %s220
      %s222 = smul.u32 32, %s15
      %v223 = vld [vmem:[%s209] sm:$0xf]
      %v224 = vld [vmem:[%s209 + $0x4] sm:$0xf]
      %v225 = vld [vmem:[%s209 + $0x8] sm:$0xf]
      %v226 = vld [vmem:[%s209 + $0xc] sm:$0xf]
      %v227 = vld [vmem:[%s209 + $0x10] sm:$0xf]
      %v228 = vld [vmem:[%s209 + $0x14] sm:$0xf]
      %v229 = vld [vmem:[%s209 + $0x18] sm:$0xf]
      %v230 = vld [vmem:[%s209 + $0x1c] sm:$0xf]
      %v231 = vld [vmem:[%s209 + $0x20] sm:$0xf]
      %v232 = vld [vmem:[%s209 + $0x24] sm:$0xf]
      %v233 = vld [vmem:[%s209 + $0x28] sm:$0xf]
      %v234 = vld [vmem:[%s209 + $0x2c] sm:$0xf]
      %v235 = vld [vmem:[%s209 + $0x30] sm:$0xf]
      %v236 = vld [vmem:[%s209 + $0x34] sm:$0xf]
      %v237 = vld [vmem:[%s209 + $0x38] sm:$0xf]
      %v238 = vld [vmem:[%s209 + $0x3c] sm:$0xf]
      %v239 = vld [vmem:[%s209 + $0x40] sm:$0xf]
      %v240 = vld [vmem:[%s209 + $0x44] sm:$0xf]
      %v241 = vld [vmem:[%s209 + $0x48] sm:$0xf]
      %v242 = vld [vmem:[%s209 + $0x4c] sm:$0xf]
      %v243 = vld [vmem:[%s209 + $0x50] sm:$0xf]
      %v244 = vld [vmem:[%s209 + $0x54] sm:$0xf]
      %v245 = vld [vmem:[%s209 + $0x58] sm:$0xf]
      %v246 = vld [vmem:[%s209 + $0x5c] sm:$0xf]
      %v247 = vld [vmem:[%s209 + $0x60] sm:$0xf]
      %v248 = vld [vmem:[%s209 + $0x64] sm:$0xf]
      %v249 = vld [vmem:[%s209 + $0x68] sm:$0xf]
      %v250 = vld [vmem:[%s209 + $0x6c] sm:$0xf]
      %v251 = vld [vmem:[%s209 + $0x70] sm:$0xf]
      %v252 = vld [vmem:[%s209 + $0x74] sm:$0xf]
      %v253 = vld [vmem:[%s209 + $0x78] sm:$0xf]
      %v254 = vld [vmem:[%s209 + $0x7c] sm:$0xf]
      %v255 = vunpack.c.l.bf16 %v223
      %v256 = vunpack.c.l.bf16 %v224
      %v257 = vunpack.c.l.bf16 %v225
      %v258 = vunpack.c.l.bf16 %v226
      %v259 = vunpack.c.l.bf16 %v227
      %v260 = vunpack.c.l.bf16 %v228
      %v261 = vunpack.c.l.bf16 %v229
      %v262 = vunpack.c.l.bf16 %v230
      %v263 = vunpack.c.l.bf16 %v231
      %v264 = vunpack.c.l.bf16 %v232
      %v265 = vunpack.c.l.bf16 %v233
      %v266 = vunpack.c.l.bf16 %v234
      %v267 = vunpack.c.l.bf16 %v235
      %v268 = vunpack.c.l.bf16 %v236
      %v269 = vunpack.c.l.bf16 %v237
      %v270 = vunpack.c.l.bf16 %v238
      %v271 = vunpack.c.l.bf16 %v239
      %v272 = vunpack.c.l.bf16 %v240
      %v273 = vunpack.c.l.bf16 %v241
      %v274 = vunpack.c.l.bf16 %v242
      %v275 = vunpack.c.l.bf16 %v243
      %v276 = vunpack.c.l.bf16 %v244
      %v277 = vunpack.c.l.bf16 %v245
      %v278 = vunpack.c.l.bf16 %v246
      %v279 = vunpack.c.l.bf16 %v247
      %v280 = vunpack.c.l.bf16 %v248
      %v281 = vunpack.c.l.bf16 %v249
      %v282 = vunpack.c.l.bf16 %v250
      %v283 = vunpack.c.l.bf16 %v251
      %v284 = vunpack.c.l.bf16 %v252
      %v285 = vunpack.c.l.bf16 %v253
      %v286 = vunpack.c.l.bf16 %v254
      %v287 = vld [vmem:[%s1] sm:$0x1]
      %v289 = vlaneseq
      %v290 = vshrl.u32 %v289, 7
      %v291 = vsub.s32 0, %v290
      %v292 = vrot.slane %v287, %v291
      %v294 = vmul.f32 %v255, %v292
      %v295 = vmul.f32 %v256, %v292
      %v296 = vmul.f32 %v257, %v292
      %v297 = vmul.f32 %v258, %v292
      %v298 = vmul.f32 %v259, %v292
      %v299 = vmul.f32 %v260, %v292
      %v300 = vmul.f32 %v261, %v292
      %v301 = vmul.f32 %v262, %v292
      %v302 = vmul.f32 %v263, %v292
      %v303 = vmul.f32 %v264, %v292
      %v304 = vmul.f32 %v265, %v292
      %v305 = vmul.f32 %v266, %v292
      %v306 = vmul.f32 %v267, %v292
      %v307 = vmul.f32 %v268, %v292
      %v308 = vmul.f32 %v269, %v292
      %v309 = vmul.f32 %v270, %v292
      %v310 = vmul.f32 %v271, %v292
      %v311 = vmul.f32 %v272, %v292
      %v312 = vmul.f32 %v273, %v292
      %v313 = vmul.f32 %v274, %v292
      %v314 = vmul.f32 %v275, %v292
      %v315 = vmul.f32 %v276, %v292
      %v316 = vmul.f32 %v277, %v292
      %v317 = vmul.f32 %v278, %v292
      %v318 = vmul.f32 %v279, %v292
      %v319 = vmul.f32 %v280, %v292
      %v320 = vmul.f32 %v281, %v292
      %v321 = vmul.f32 %v282, %v292
      %v322 = vmul.f32 %v283, %v292
      %v323 = vmul.f32 %v284, %v292
      %v324 = vmul.f32 %v285, %v292
      %v325 = vmul.f32 %v286, %v292
      %v326 = vld [vmem:[%s2] sm:$0x1]
      %v328 = vlaneseq
      %v329 = vshrl.u32 %v328, 7
      %v330 = vsub.s32 0, %v329
      %v331 = vrot.slane %v326, %v330
      %v333 = vadd.f32 %v294, %v331
      %v334 = vadd.f32 %v295, %v331
      %v335 = vadd.f32 %v296, %v331
      %v336 = vadd.f32 %v297, %v331
      %v337 = vadd.f32 %v298, %v331
      %v338 = vadd.f32 %v299, %v331
      %v339 = vadd.f32 %v300, %v331
      %v340 = vadd.f32 %v301, %v331
      %v341 = vadd.f32 %v302, %v331
      %v342 = vadd.f32 %v303, %v331
      %v343 = vadd.f32 %v304, %v331
      %v344 = vadd.f32 %v305, %v331
      %v345 = vadd.f32 %v306, %v331
      %v346 = vadd.f32 %v307, %v331
      %v347 = vadd.f32 %v308, %v331
      %v348 = vadd.f32 %v309, %v331
      %v349 = vadd.f32 %v310, %v331
      %v350 = vadd.f32 %v311, %v331
      %v351 = vadd.f32 %v312, %v331
      %v352 = vadd.f32 %v313, %v331
      %v353 = vadd.f32 %v314, %v331
      %v354 = vadd.f32 %v315, %v331
      %v355 = vadd.f32 %v316, %v331
      %v356 = vadd.f32 %v317, %v331
      %v357 = vadd.f32 %v318, %v331
      %v358 = vadd.f32 %v319, %v331
      %v359 = vadd.f32 %v320, %v331
      %v360 = vadd.f32 %v321, %v331
      %v361 = vadd.f32 %v322, %v331
      %v362 = vadd.f32 %v323, %v331
      %v363 = vadd.f32 %v324, %v331
      %v364 = vadd.f32 %v325, %v331
      %v365 = vld [vmem:[%s215] sm:$0xf]
      %v366 = vld [vmem:[%s215 + $0x4] sm:$0xf]
      %v367 = vld [vmem:[%s215 + $0x8] sm:$0xf]
      %v368 = vld [vmem:[%s215 + $0xc] sm:$0xf]
      %v369 = vld [vmem:[%s215 + $0x10] sm:$0xf]
      %v370 = vld [vmem:[%s215 + $0x14] sm:$0xf]
      %v371 = vld [vmem:[%s215 + $0x18] sm:$0xf]
      %v372 = vld [vmem:[%s215 + $0x1c] sm:$0xf]
      %v373 = vld [vmem:[%s215 + $0x20] sm:$0xf]
      %v374 = vld [vmem:[%s215 + $0x24] sm:$0xf]
      %v375 = vld [vmem:[%s215 + $0x28] sm:$0xf]
      %v376 = vld [vmem:[%s215 + $0x2c] sm:$0xf]
      %v377 = vld [vmem:[%s215 + $0x30] sm:$0xf]
      %v378 = vld [vmem:[%s215 + $0x34] sm:$0xf]
      %v379 = vld [vmem:[%s215 + $0x38] sm:$0xf]
      %v380 = vld [vmem:[%s215 + $0x3c] sm:$0xf]
      %v381 = vld [vmem:[%s215 + $0x40] sm:$0xf]
      %v382 = vld [vmem:[%s215 + $0x44] sm:$0xf]
      %v383 = vld [vmem:[%s215 + $0x48] sm:$0xf]
      %v384 = vld [vmem:[%s215 + $0x4c] sm:$0xf]
      %v385 = vld [vmem:[%s215 + $0x50] sm:$0xf]
      %v386 = vld [vmem:[%s215 + $0x54] sm:$0xf]
      %v387 = vld [vmem:[%s215 + $0x58] sm:$0xf]
      %v388 = vld [vmem:[%s215 + $0x5c] sm:$0xf]
      %v389 = vld [vmem:[%s215 + $0x60] sm:$0xf]
      %v390 = vld [vmem:[%s215 + $0x64] sm:$0xf]
      %v391 = vld [vmem:[%s215 + $0x68] sm:$0xf]
      %v392 = vld [vmem:[%s215 + $0x6c] sm:$0xf]
      %v393 = vld [vmem:[%s215 + $0x70] sm:$0xf]
      %v394 = vld [vmem:[%s215 + $0x74] sm:$0xf]
      %v395 = vld [vmem:[%s215 + $0x78] sm:$0xf]
      %v396 = vld [vmem:[%s215 + $0x7c] sm:$0xf]
      %v397 = vunpack.c.l.bf16 %v365
      %v398 = vunpack.c.l.bf16 %v366
      %v399 = vunpack.c.l.bf16 %v367
      %v400 = vunpack.c.l.bf16 %v368
      %v401 = vunpack.c.l.bf16 %v369
      %v402 = vunpack.c.l.bf16 %v370
      %v403 = vunpack.c.l.bf16 %v371
      %v404 = vunpack.c.l.bf16 %v372
      %v405 = vunpack.c.l.bf16 %v373
      %v406 = vunpack.c.l.bf16 %v374
      %v407 = vunpack.c.l.bf16 %v375
      %v408 = vunpack.c.l.bf16 %v376
      %v409 = vunpack.c.l.bf16 %v377
      %v410 = vunpack.c.l.bf16 %v378
      %v411 = vunpack.c.l.bf16 %v379
      %v412 = vunpack.c.l.bf16 %v380
      %v413 = vunpack.c.l.bf16 %v381
      %v414 = vunpack.c.l.bf16 %v382
      %v415 = vunpack.c.l.bf16 %v383
      %v416 = vunpack.c.l.bf16 %v384
      %v417 = vunpack.c.l.bf16 %v385
      %v418 = vunpack.c.l.bf16 %v386
      %v419 = vunpack.c.l.bf16 %v387
      %v420 = vunpack.c.l.bf16 %v388
      %v421 = vunpack.c.l.bf16 %v389
      %v422 = vunpack.c.l.bf16 %v390
      %v423 = vunpack.c.l.bf16 %v391
      %v424 = vunpack.c.l.bf16 %v392
      %v425 = vunpack.c.l.bf16 %v393
      %v426 = vunpack.c.l.bf16 %v394
      %v427 = vunpack.c.l.bf16 %v395
      %v428 = vunpack.c.l.bf16 %v396
      %v429 = vadd.f32 %v333, %v397
      %v430 = vadd.f32 %v334, %v398
      %v431 = vadd.f32 %v335, %v399
      %v432 = vadd.f32 %v336, %v400
      %v433 = vadd.f32 %v337, %v401
      %v434 = vadd.f32 %v338, %v402
      %v435 = vadd.f32 %v339, %v403
      %v436 = vadd.f32 %v340, %v404
      %v437 = vadd.f32 %v341, %v405
      %v438 = vadd.f32 %v342, %v406
      %v439 = vadd.f32 %v343, %v407
      %v440 = vadd.f32 %v344, %v408
      %v441 = vadd.f32 %v345, %v409
      %v442 = vadd.f32 %v346, %v410
      %v443 = vadd.f32 %v347, %v411
      %v444 = vadd.f32 %v348, %v412
      %v445 = vadd.f32 %v349, %v413
      %v446 = vadd.f32 %v350, %v414
      %v447 = vadd.f32 %v351, %v415
      %v448 = vadd.f32 %v352, %v416
      %v449 = vadd.f32 %v353, %v417
      %v450 = vadd.f32 %v354, %v418
      %v451 = vadd.f32 %v355, %v419
      %v452 = vadd.f32 %v356, %v420
      %v453 = vadd.f32 %v357, %v421
      %v454 = vadd.f32 %v358, %v422
      %v455 = vadd.f32 %v359, %v423
      %v456 = vadd.f32 %v360, %v424
      %v457 = vadd.f32 %v361, %v425
      %v458 = vadd.f32 %v362, %v426
      %v459 = vadd.f32 %v363, %v427
      %v460 = vadd.f32 %v364, %v428
      %v461 = vmax.f32 %v429, 0.0
      %v462 = vmax.f32 %v430, 0.0
      %v463 = vmax.f32 %v431, 0.0
      %v464 = vmax.f32 %v432, 0.0
      %v465 = vmax.f32 %v433, 0.0
      %v466 = vmax.f32 %v434, 0.0
      %v467 = vmax.f32 %v435, 0.0
      %v468 = vmax.f32 %v436, 0.0
      %v469 = vmax.f32 %v437, 0.0
      %v470 = vmax.f32 %v438, 0.0
      %v471 = vmax.f32 %v439, 0.0
      %v472 = vmax.f32 %v440, 0.0
      %v473 = vmax.f32 %v441, 0.0
      %v474 = vmax.f32 %v442, 0.0
      %v475 = vmax.f32 %v443, 0.0
      %v476 = vmax.f32 %v444, 0.0
      %v477 = vmax.f32 %v445, 0.0
      %v478 = vmax.f32 %v446, 0.0
      %v479 = vmax.f32 %v447, 0.0
      %v480 = vmax.f32 %v448, 0.0
      %v481 = vmax.f32 %v449, 0.0
      %v482 = vmax.f32 %v450, 0.0
      %v483 = vmax.f32 %v451, 0.0
      %v484 = vmax.f32 %v452, 0.0
      %v485 = vmax.f32 %v453, 0.0
      %v486 = vmax.f32 %v454, 0.0
      %v487 = vmax.f32 %v455, 0.0
      %v488 = vmax.f32 %v456, 0.0
      %v489 = vmax.f32 %v457, 0.0
      %v490 = vmax.f32 %v458, 0.0
      %v491 = vmax.f32 %v459, 0.0
      %v492 = vmax.f32 %v460, 0.0
      %v493 = vpack.c.bf16 %v462, %v461
      %v494 = vpack.c.bf16 %v464, %v463
      %v495 = vpack.c.bf16 %v466, %v465
      %v496 = vpack.c.bf16 %v468, %v467
      %v497 = vpack.c.bf16 %v470, %v469
      %v498 = vpack.c.bf16 %v472, %v471
      %v499 = vpack.c.bf16 %v474, %v473
      %v500 = vpack.c.bf16 %v476, %v475
      %v501 = vpack.c.bf16 %v478, %v477
      %v502 = vpack.c.bf16 %v480, %v479
      %v503 = vpack.c.bf16 %v482, %v481
      %v504 = vpack.c.bf16 %v484, %v483
      %v505 = vpack.c.bf16 %v486, %v485
      %v506 = vpack.c.bf16 %v488, %v487
      %v507 = vpack.c.bf16 %v490, %v489
      %v508 = vpack.c.bf16 %v492, %v491
      %v525 = vunpack.c.l.b16 %v493
      %v526 = vunpack.c.h.b16 %v493
      %v527 = vunpack.c.l.b16 %v494
      %v528 = vunpack.c.h.b16 %v494
      %v529 = vunpack.c.l.b16 %v495
      %v530 = vunpack.c.h.b16 %v495
      %v531 = vunpack.c.l.b16 %v496
      %v532 = vunpack.c.h.b16 %v496
      %v533 = vunpack.c.l.b16 %v497
      %v534 = vunpack.c.h.b16 %v497
      %v535 = vunpack.c.l.b16 %v498
      %v536 = vunpack.c.h.b16 %v498
      %v537 = vunpack.c.l.b16 %v499
      %v538 = vunpack.c.h.b16 %v499
      %v539 = vunpack.c.l.b16 %v500
      %v540 = vunpack.c.h.b16 %v500
      %v541 = vunpack.c.l.b16 %v501
      %v542 = vunpack.c.h.b16 %v501
      %v543 = vunpack.c.l.b16 %v502
      %v544 = vunpack.c.h.b16 %v502
      %v545 = vunpack.c.l.b16 %v503
      %v546 = vunpack.c.h.b16 %v503
      %v547 = vunpack.c.l.b16 %v504
      %v548 = vunpack.c.h.b16 %v504
      %v549 = vunpack.c.l.b16 %v505
      %v550 = vunpack.c.h.b16 %v505
      %v551 = vunpack.c.l.b16 %v506
      %v552 = vunpack.c.h.b16 %v506
      %v553 = vunpack.c.l.b16 %v507
      %v554 = vunpack.c.h.b16 %v507
      %v555 = vunpack.c.l.b16 %v508
      %v556 = vunpack.c.h.b16 %v508
      %v557 = vpack.c.b16 %v525, %v525
      %v558 = vpack.c.b16 %v526, %v526
      %v559 = vpack.c.b16 %v527, %v527
      %v560 = vpack.c.b16 %v528, %v528
      %v561 = vpack.c.b16 %v529, %v529
      %v562 = vpack.c.b16 %v530, %v530
      %v563 = vpack.c.b16 %v531, %v531
      %v564 = vpack.c.b16 %v532, %v532
      %v565 = vpack.c.b16 %v533, %v533
      %v566 = vpack.c.b16 %v534, %v534
      %v567 = vpack.c.b16 %v535, %v535
      %v568 = vpack.c.b16 %v536, %v536
      %v569 = vpack.c.b16 %v537, %v537
      %v570 = vpack.c.b16 %v538, %v538
      %v571 = vpack.c.b16 %v539, %v539
      %v572 = vpack.c.b16 %v540, %v540
      %v573 = vpack.c.b16 %v541, %v541
      %v574 = vpack.c.b16 %v542, %v542
      %v575 = vpack.c.b16 %v543, %v543
      %v576 = vpack.c.b16 %v544, %v544
      %v577 = vpack.c.b16 %v545, %v545
      %v578 = vpack.c.b16 %v546, %v546
      %v579 = vpack.c.b16 %v547, %v547
      %v580 = vpack.c.b16 %v548, %v548
      %v581 = vpack.c.b16 %v549, %v549
      %v582 = vpack.c.b16 %v550, %v550
      %v583 = vpack.c.b16 %v551, %v551
      %v584 = vpack.c.b16 %v552, %v552
      %v585 = vpack.c.b16 %v553, %v553
      %v586 = vpack.c.b16 %v554, %v554
      %v587 = vpack.c.b16 %v555, %v555
      %v588 = vpack.c.b16 %v556, %v556
      %621 = vst [vmem:[%s221] sm:$0xf] %v557
      %622 = vst [vmem:[%s221 + $0x4] sm:$0xf] %v558
      %623 = vst [vmem:[%s221 + $0x8] sm:$0xf] %v559
      %624 = vst [vmem:[%s221 + $0xc] sm:$0xf] %v560
      %625 = vst [vmem:[%s221 + $0x10] sm:$0xf] %v561
      %626 = vst [vmem:[%s221 + $0x14] sm:$0xf] %v562
      %627 = vst [vmem:[%s221 + $0x18] sm:$0xf] %v563
      %628 = vst [vmem:[%s221 + $0x1c] sm:$0xf] %v564
      %629 = vst [vmem:[%s221 + $0x20] sm:$0xf] %v565
      %630 = vst [vmem:[%s221 + $0x24] sm:$0xf] %v566
      %631 = vst [vmem:[%s221 + $0x28] sm:$0xf] %v567
      %632 = vst [vmem:[%s221 + $0x2c] sm:$0xf] %v568
      %633 = vst [vmem:[%s221 + $0x30] sm:$0xf] %v569
      %634 = vst [vmem:[%s221 + $0x34] sm:$0xf] %v570
      %635 = vst [vmem:[%s221 + $0x38] sm:$0xf] %v571
      %636 = vst [vmem:[%s221 + $0x3c] sm:$0xf] %v572
      %637 = vst [vmem:[%s221 + $0x40] sm:$0xf] %v573
      %638 = vst [vmem:[%s221 + $0x44] sm:$0xf] %v574
      %639 = vst [vmem:[%s221 + $0x48] sm:$0xf] %v575
      %640 = vst [vmem:[%s221 + $0x4c] sm:$0xf] %v576
      %641 = vst [vmem:[%s221 + $0x50] sm:$0xf] %v577
      %642 = vst [vmem:[%s221 + $0x54] sm:$0xf] %v578
      %643 = vst [vmem:[%s221 + $0x58] sm:$0xf] %v579
      %644 = vst [vmem:[%s221 + $0x5c] sm:$0xf] %v580
      %645 = vst [vmem:[%s221 + $0x60] sm:$0xf] %v581
      %646 = vst [vmem:[%s221 + $0x64] sm:$0xf] %v582
      %647 = vst [vmem:[%s221 + $0x68] sm:$0xf] %v583
      %648 = vst [vmem:[%s221 + $0x6c] sm:$0xf] %v584
      %649 = vst [vmem:[%s221 + $0x70] sm:$0xf] %v585
      %650 = vst [vmem:[%s221 + $0x74] sm:$0xf] %v586
      %651 = vst [vmem:[%s221 + $0x78] sm:$0xf] %v587
      %652 = vst [vmem:[%s221 + $0x7c] sm:$0xf] %v588
      %s653 = smul.u32 32, %s15
      %p654 = scmp.lt.s32.totalorder %s653, 63
      %s655 = scalar_select %p654, %s653, 63
      %s656 = smul.addr %s655, 4
      %s657 = scalar_lea.vmem %s4, %s656
      // Predicated region
      $region37: #{decoder_group_forward.33} parent=35 // pred_check
        %p658 = pneg %p127
      $region38: #{decoder_group_forward.33} parent=35 // pred_check_branch
        %660 = sbr.rel (%p658) target = $region40
      $region39: #{decoder_group_forward.33} parent=35 // pred_region
        %s661 = smul.u32 32, %s15
      $region40: #{decoder_group_forward.33} parent=35 // pred_fallthru
        _
    $region36: #{decoder_group_forward.33} parent=5 // pred_fallthru
      _
    %p662 = scmp.le.s32.totalorder 2, %s10
    // Predicated region
    $region41: #{decoder_group_forward.33} parent=5 // pred_check
      %p663 = pneg %p662
    $region42: #{decoder_group_forward.33} parent=5 // pred_check_branch
      %665 = sbr.rel (%p663) target = $region44
    $region43: #{decoder_group_forward.33} parent=5 // pred_region
      %s666 = ssub.s32 %s10, 2
      // Predicated region
      $region45: #{decoder_group_forward.33} parent=43 // pred_check
        %p667 = pneg %p133
      $region46: #{decoder_group_forward.33} parent=43 // pred_check_branch
        %669 = sbr.rel (%p667) target = $region48
      $region47: #{decoder_group_forward.33} parent=43 // pred_region
        %s670 = smul.u32 32, %s16
        %p671 = scmp.lt.s32.totalorder %s670, 63
        %s672 = scalar_select %p671, %s670, 63
        %s673 = smul.addr %s672, 4
        %s674 = scalar_lea.vmem %s4, %s673
      $region48: #{decoder_group_forward.33} parent=43 // pred_fallthru
        _
    $region44: #{decoder_group_forward.33} parent=5 // pred_fallthru
      _
  $region6: #{decoder_group_forward.33} parent=0 // loop_footer
    %s14 = sadd.s32 1, %s10
  $region7: #{decoder_group_forward.33} parent=0 // loop_footer_branch
    %9 = sbr.rel target = $region3
  $region8: #{decoder_group_forward.33} parent=0 // loop_exit
    _

</llo_original>
